<compile_context>
chip_gen: v6e
topology: v6e:2x2x1
jax: 0.10.0
libtpu: 0.0.40
codegen_flags: <defaults>
</compile_context>

<pallas_src>
import functools

import jax
import jax.numpy as jnp
from jax import lax
from jax.experimental import pallas as pl
from jax.experimental.pallas import tpu as pltpu

_LANE = 128
_MASK_VAL = -1e30  # finite "-inf" sentinel (keeps fully-masked rows NaN-free)


def _round_up(x, m):
    return (x + m - 1) // m * m


def _leaky_relu(x, alpha):
    # maximum(x, a*x) == leaky_relu(x) for 0 <= a <= 1 (2 VPU ops instead of 3).
    a = jnp.asarray(alpha, x.dtype)
    if 0.0 <= float(alpha) <= 1.0:
        return jnp.maximum(x, a * x)
    return jnp.where(x >= 0, x, a * x)


def _pad2(x, rows, cols):
    pr, pc = rows - x.shape[0], cols - x.shape[1]
    if pr == 0 and pc == 0:
        return x  # skip the full-copy pad when shapes are already aligned
    return jnp.pad(x, ((0, pr), (0, pc)))


def _tpu_flavor():
    """Returns (new_gen, is_v7). new_gen => 256x256-MXU generation (v6e/v7x)."""
    try:
        kind = jax.devices()[0].device_kind.lower()
    except Exception:
        return True, False
    is_v7 = ("v7" in kind) or ("tpu7" in kind)
    old = any(t in kind for t in ("v2", "v3", "v4", "v5")) and not is_v7
    return (not old), is_v7


def _spec(shape, index_map, *, single_buffer=False):
    """BlockSpec, optionally single-buffered (falls back if unsupported)."""
    if single_buffer:
        try:
            return pl.BlockSpec(shape, index_map, pipeline_mode=pl.Buffered(1))
        except Exception:
            pass
    return pl.BlockSpec(shape, index_map)


# ---------------------------------------------------------------------------
# Kernel A (small-N fused path): projection + scores + masked softmax + output
# in a single pallas_call.  Everything lives in VMEM; no h/s HBM round trip.
# ---------------------------------------------------------------------------
def _fused_kernel(nodes_ref, w_ref, adj_ref, out_ref, *, fop, alpha,
                  approx_recip, mxu_dtype):
    # h_aug = nodes @ [W^T | W^T a1 | W^T a2 | 0...]   -> one MXU matmul.
    h_aug = jnp.dot(nodes_ref[...], w_ref[...],
                    preferred_element_type=jnp.float32)          # (NP, FOP+128)
    h = h_aug[:, :fop]                                           # (NP, FOP) f32
    s1 = h_aug[:, fop:fop + 1]                                   # (NP, 1)
    s2 = h_aug[:, fop + 1:fop + 2]                               # (NP, 1)

    # Broadcast s2 along lanes with a rank-1 MXU outer product (avoids an
    # in-kernel (NP,1)->(1,NP) transpose): s2_b[k, j] = s2[j].
    ones = jnp.ones_like(s2)
    s2_b = lax.dot_general(ones, s2, (((1,), (1,)), ((), ())),
                           preferred_element_type=jnp.float32)   # (NP, NP)
    e = _leaky_relu(s1 + s2_b, alpha)                            # (NP, NP) f32

    adj = adj_ref[...]                                           # (NP, NP) f32
    logits = jnp.dot(adj.astype(mxu_dtype), e.astype(mxu_dtype),
                     preferred_element_type=jnp.float32)         # (NP, NP)
    logits = jnp.where(adj >= 0.5, logits, _MASK_VAL)

    m = jnp.max(logits, axis=1, keepdims=True)
    p = jnp.exp(logits - m)
    l = jnp.sum(p, axis=1, keepdims=True)
    inv_l = pl.reciprocal(l, approx=True) if approx_recip else 1.0 / l
    attn = p * inv_l
    # TODO(synk): F.dropout on the attention weights is identity (eval mode).
    out = jnp.dot(attn.astype(mxu_dtype), h.astype(mxu_dtype),
                  preferred_element_type=jnp.float32)
    out_ref[...] = _leaky_relu(out, alpha).astype(out_ref.dtype)


# ---------------------------------------------------------------------------
# Kernel B1 (tiled path, stage 1): fused projection
#   h_aug = nodes @ [W^T | W^T a1 | W^T a2]
# ---------------------------------------------------------------------------
def _proj_kernel(nodes_ref, w_ref, h_ref, s_ref, *, fop):
    h_aug = jnp.dot(nodes_ref[...], w_ref[...],
                    preferred_element_type=jnp.float32)          # (TM, FOP+128)
    h_ref[...] = h_aug[:, :fop].astype(h_ref.dtype)              # node features
    s_ref[...] = h_aug[:, fop:]                                  # lanes 0/1 = s1/s2


# ---------------------------------------------------------------------------
# Kernel B2 (tiled path, stage 2): attention with flash-style online softmax
#   grid = (query row blocks ["parallel"], key column blocks ["arbitrary"])
# ---------------------------------------------------------------------------
def _attn_tiled_kernel(adj_slab_ref, h_ref, s1_ref, s2_ref, out_ref,
                       adj_sc, m_sc, l_sc, acc_sc, *,
                       alpha, tn, approx_recip, h_resident):
    kj = pl.program_id(1)
    nkj = pl.num_programs(1)

    @pl.when(kj == 0)
    def _init():
        # Stage the f32 adjacency row slab in MXU dtype ONCE per query block
        # (adj is read from HBM exactly once and never duplicated).
        adj_sc[...] = adj_slab_ref[...].astype(adj_sc.dtype)
        m_sc[...] = jnp.full_like(m_sc, _MASK_VAL)
        l_sc[...] = jnp.zeros_like(l_sc)
        acc_sc[...] = jnp.zeros_like(acc_sc)

    # eT[j, k] = leaky_relu(s1[k] + s2[j]) for this key-column block j.
    # (bf16 VPU math on v6e/v7x via operand dtypes; f32 on v5e / parity path.)
    eT = _leaky_relu(s1_ref[...] + s2_ref[...], alpha)           # (tn, NP)
    eT = eT.astype(adj_sc.dtype)                                 # no-op on fast path

    # logits[i, j] = sum_k adj[i, k] * eT[j, k]   (RHS-transposed MXU matmul)
    logits = lax.dot_general(adj_sc[...], eT, (((1,), (1,)), ((), ())),
                             preferred_element_type=jnp.float32)  # (tm, tn)

    # Fused mask, sliced from the already-resident f32 slab (exact threshold).
    col0 = pl.multiple_of(kj * tn, _LANE)
    mask = adj_slab_ref[:, pl.ds(col0, tn)] >= 0.5
    logits = jnp.where(mask, logits, _MASK_VAL)

    # Online softmax update (all carried state stays f32).
    m_prev = m_sc[...]
    m_new = jnp.maximum(m_prev, jnp.max(logits, axis=1, keepdims=True))
    corr = jnp.exp(m_prev - m_new)
    p = jnp.exp(logits - m_new)                                  # (tm, tn) f32
    l_sc[...] = corr * l_sc[...] + jnp.sum(p, axis=1, keepdims=True)
    h_blk = h_ref[pl.ds(col0, tn), :] if h_resident else h_ref[...]
    acc_sc[...] = corr * acc_sc[...] + jnp.dot(
        p.astype(h_blk.dtype), h_blk, preferred_element_type=jnp.float32)
    m_sc[...] = m_new

    @pl.when(kj == nkj - 1)
    def _finalize():
        # TODO(synk): F.dropout on the attention weights is identity (eval).
        inv_l = (pl.reciprocal(l_sc[...], approx=True) if approx_recip
                 else 1.0 / l_sc[...])
        out_ref[...] = _leaky_relu(acc_sc[...] * inv_l, alpha).astype(out_ref.dtype)


# ---------------------------------------------------------------------------
# Wrappers
# ---------------------------------------------------------------------------
def _forward_fused(nodes, adj, wt_aug, np_, fip, fop, alpha, mxu_dtype,
                   approx_recip, vmem_cap):
    nodes_m = _pad2(nodes, np_, fip).astype(mxu_dtype)
    adj_p = _pad2(adj, np_, np_)                    # stays f32; cast in-kernel

    return pl.pallas_call(
        functools.partial(_fused_kernel, fop=fop, alpha=alpha,
                          approx_recip=approx_recip, mxu_dtype=mxu_dtype),
        out_shape=jax.ShapeDtypeStruct((np_, fop), jnp.float32),
        grid_spec=pltpu.PrefetchScalarGridSpec(
            num_scalar_prefetch=0,
            grid=(1,),
            in_specs=[
                pl.BlockSpec((np_, fip), lambda i: (0, 0)),
                pl.BlockSpec((fip, fop + _LANE), lambda i: (0, 0)),
                pl.BlockSpec((np_, np_), lambda i: (0, 0)),
            ],
            out_specs=pl.BlockSpec((np_, fop), lambda i: (0, 0)),
        ),
        compiler_params=pltpu.CompilerParams(
            dimension_semantics=("arbitrary",),
            vmem_limit_bytes=int(min(vmem_cap, 64 << 20)),
        ),
    )(nodes_m, wt_aug, adj_p)


def _forward_tiled(nodes, adj, wt_aug, n, fip, fop, alpha, mxu_dtype,
                   approx_recip, new_gen, is_v7, vmem_cap,
                   h_resident_max_bytes):
    f32 = jnp.float32
    mxu_bytes = jnp.dtype(mxu_dtype).itemsize

    # Generation-tuned attention tiles: 256 fills the 256x256 MXU on v6e/v7x;
    # keep 128 on v5e and when the graph is too small for >=2 query blocks
    # (so the "parallel" qi axis can still split across v7x's two TCs).
    tile = 256 if (new_gen and n > 256) else 128
    np_ = _round_up(n, tile)
    tm = tn = tile

    nodes_m = _pad2(nodes, np_, fip).astype(mxu_dtype)
    adj_p = _pad2(adj, np_, np_)   # f32 in HBM; staged to MXU dtype in-kernel

    # ---- stage 1: fused projection ---------------------------------------
    h_p, s_p = pl.pallas_call(
        functools.partial(_proj_kernel, fop=fop),
        out_shape=(jax.ShapeDtypeStruct((np_, fop), mxu_dtype),
                   jax.ShapeDtypeStruct((np_, _LANE), f32)),
        grid_spec=pltpu.PrefetchScalarGridSpec(
            num_scalar_prefetch=0,
            grid=(np_ // tm,),
            in_specs=[pl.BlockSpec((tm, fip), lambda i: (i, 0)),
                      pl.BlockSpec((fip, fop + _LANE), lambda i: (0, 0))],
            out_specs=(pl.BlockSpec((tm, fop), lambda i: (i, 0)),
                       pl.BlockSpec((tm, _LANE), lambda i: (i, 0))),
        ),
        compiler_params=pltpu.CompilerParams(
            dimension_semantics=("parallel",)),
    )(nodes_m, wt_aug)

    # Lane-dense per-key a1 scores as a (1, N) row; a2 scores as a column that
    # is sliced per key block (tiny, lane-padded only per (tn, 1) block).
    score_dtype = mxu_dtype if (new_gen and mxu_dtype == jnp.bfloat16) else f32
    s1_row = jnp.transpose(s_p[:, 0:1]).astype(score_dtype)      # (1, NP)
    s2_col = s_p[:, 1:2].astype(score_dtype)                     # (NP, 1)
    score_bytes = jnp.dtype(score_dtype).itemsize

    h_bytes = np_ * fop * mxu_bytes
    if h_resident_max_bytes is None:
        h_resident_max_bytes = (8 << 20) if is_v7 else (16 << 20)
    h_resident = h_bytes <= h_resident_max_bytes

    def run(single_buffer):
        in_specs = [
            # full-key adjacency row slab, f32, fetched once per qi
            _spec((tm, np_), lambda qi, kj: (qi, 0), single_buffer=single_buffer),
            # projected key features: fully resident or streamed per key block
            (_spec((np_, fop), lambda qi, kj: (0, 0), single_buffer=single_buffer)
             if h_resident
             else pl.BlockSpec((tn, fop), lambda qi, kj: (kj, 0))),
            # per-key a1 scores (lane-dense row, grid-invariant)
            _spec((1, np_), lambda qi, kj: (0, 0), single_buffer=single_buffer),
            # per-key a2 scores for this key block
            pl.BlockSpec((tn, 1), lambda qi, kj: (kj, 0)),
        ]
        slab_bufs = 1 if single_buffer else 2
        need = (slab_bufs * tm * np_ * 4                    # f32 adj row slab
                + tm * np_ * mxu_bytes                      # staged MXU-dtype slab
                + (h_bytes if h_resident else 2 * tn * fop * mxu_bytes)
                + tn * np_ * (mxu_bytes + 4)                # eT temporary
                + 8 * np_ * score_bytes                     # s1 row (sublane pad)
                + 2 * tn * _LANE * score_bytes              # s2 blocks (lane pad)
                + 2 * tm * fop * 4                          # output blocks
                + tm * fop * 4 + 2 * tm * _LANE * 4         # acc / m / l scratch
                + 4 * tm * tn * 4)                          # logits/p temporaries
        vmem_limit = int(min(vmem_cap, max(2 * need, 24 << 20)))

        return pl.pallas_call(
            functools.partial(_attn_tiled_kernel, alpha=alpha, tn=tn,
                              approx_recip=approx_recip, h_resident=h_resident),
            out_shape=jax.ShapeDtypeStruct((np_, fop), f32),
            grid_spec=pltpu.PrefetchScalarGridSpec(
                num_scalar_prefetch=0,
                grid=(np_ // tm, np_ // tn),
                in_specs=in_specs,
                out_specs=pl.BlockSpec((tm, fop), lambda qi, kj: (qi, 0)),
                scratch_shapes=[
                    pltpu.VMEM((tm, np_), mxu_dtype),   # adj slab in MXU dtype
                    pltpu.VMEM((tm, 1), f32),           # running max  m
                    pltpu.VMEM((tm, 1), f32),           # running sum  l
                    pltpu.VMEM((tm, fop), f32),         # running numerator acc
                ],
            ),
            compiler_params=pltpu.CompilerParams(
                dimension_semantics=("parallel", "arbitrary"),
                vmem_limit_bytes=vmem_limit),
        )(adj_p, h_p, s1_row, s2_col)

    try:
        return run(single_buffer=True)
    except Exception:
        # pl.Buffered(1) unsupported on this JAX/Mosaic version -> default
        # double buffering (only costs VMEM headroom, never correctness).
        return run(single_buffer=False)


def condense_attn(nodes, adj, w, a, *, alpha=0.2, mxu_dtype=jnp.bfloat16,
                  fused_max_nodes=512, h_resident_max_bytes=None):
    """
    nodes: (N, Fin) float32     adj: (N, N) float32 (0/1)
    w:     (Fout, Fin)  = nn.Linear(in, out, bias=False).weight
    a:     (1, 2*Fout)  = nn.Linear(2*out, 1, bias=False).weight
    returns (N, Fout) float32.

    mxu_dtype: dtype of the MXU matmul operands (bf16 recommended on TPU;
               float32 reproduces the module's f32 numerics).
    fused_max_nodes: padded-N threshold below which the single fused kernel
               (projection + attention in one pallas_call) is used.
    """
    n, fin = nodes.shape
    fout = w.shape[0]
    f32 = jnp.float32
    nodes = nodes.astype(f32)
    adj = adj.astype(f32)
    w = w.astype(f32)
    a = a.astype(f32)

    new_gen, is_v7 = _tpu_flavor()
    approx_recip = jnp.dtype(mxu_dtype) != jnp.dtype(f32)
    vmem_cap = (48 << 20) if is_v7 else (100 << 20)

    fip = _round_up(fin, _LANE)
    fop = _round_up(fout, _LANE)

    # Fold a1 / a2 into the projection weight: ONE MXU matmul produces both
    # the node features h and the two attention score vectors.
    wt = w.T                                                       # (Fin, Fout)
    a_pair = jnp.stack([a[0, :fout], a[0, fout:]], axis=1)         # (Fout, 2)
    wa = jnp.dot(wt, a_pair, precision=lax.Precision.HIGHEST)      # (Fin, 2)
    wt_p = jnp.pad(wt, ((0, fip - fin), (0, fop - fout)))
    wa_p = jnp.pad(wa, ((0, fip - fin), (0, _LANE - 2)))
    wt_aug = jnp.concatenate([wt_p, wa_p], axis=1).astype(mxu_dtype)

    np128 = _round_up(n, _LANE)
    out_p = None
    if np128 <= fused_max_nodes:
        try:
            out_p = _forward_fused(nodes, adj, wt_aug, np128, fip, fop, alpha,
                                   mxu_dtype, approx_recip, vmem_cap)
        except Exception:
            out_p = None  # fall back to the general tiled path
    if out_p is None:
        out_p = _forward_tiled(nodes, adj, wt_aug, n, fip, fop, alpha,
                               mxu_dtype, approx_recip, new_gen, is_v7,
                               vmem_cap, h_resident_max_bytes)
    return out_p[:n, :fout]


# ---------------------------------------------------------------------------
# Pure-JAX reference mirroring the PyTorch forward (eval mode)
# ---------------------------------------------------------------------------
def reference_jax(nodes, adj, w, a, alpha=0.2):
    hp = lax.Precision.HIGHEST
    fout = w.shape[0]
    h = jnp.dot(nodes, w.T, precision=hp)
    a1 = a[0, :fout]
    a2 = a[0, fout:]
    e = _leaky_relu(jnp.dot(h, a1[:, None], precision=hp)
                    + jnp.dot(h, a2[:, None], precision=hp).T, alpha)
    logits = jnp.dot(adj, e, precision=hp)
    logits = jnp.where(adj < 0.5, -jnp.inf, logits)
    attn = jax.nn.softmax(logits, axis=1)
    return _leaky_relu(jnp.dot(attn, h, precision=hp), alpha)


if __name__ == "__main__":
    def make_case(key, n, fin, fout, w_scale, a_scale):
        k_nodes, k_adj, k_w, k_a = jax.random.split(key, 4)
        nodes = jax.random.normal(k_nodes, (n, fin), dtype=jnp.float32)
        adj = (jax.random.uniform(k_adj, (n, n)) > 0.5).astype(jnp.float32)
        adj = jnp.maximum(adj, jnp.eye(n, dtype=jnp.float32))  # self-loops
        w = jax.random.normal(k_w, (fout, fin), dtype=jnp.float32) * w_scale
        a = jax.random.normal(k_a, (1, 2 * fout), dtype=jnp.float32) * a_scale
        return nodes, adj, w, a

    def check(out, ref, atol, rtol, tag):
        assert out.shape == ref.shape, (tag, out.shape, ref.shape)
        err = float(jnp.max(jnp.abs(out - ref)))
        ok = bool(jnp.allclose(out, ref, atol=atol, rtol=rtol))
        assert ok, f"{tag}: max abs err {err}"

    key = jax.random.PRNGKey(0)
    k1, k2, k3 = jax.random.split(key, 3)

    # 1) Module-scale shapes -> fused single-kernel path, strict f32 parity.
    nodes1, adj1, w1, a1 = make_case(k1, 16, 32, 32, 0.1, 0.1)
    ref1 = reference_jax(nodes1, adj1, w1, a1)
    out1 = jax.block_until_ready(
        condense_attn(nodes1, adj1, w1, a1, mxu_dtype=jnp.float32))
    check(out1, ref1, 3e-3, 3e-3, "fused/f32/n16")

    # 2) Non-multiple shapes, tiled path forced, streamed-h branch, f32 parity.
    nodes2, adj2, w2, a2 = make_case(k2, 200, 48, 40, 0.05, 0.03)
    ref2 = reference_jax(nodes2, adj2, w2, a2)
    out2 = jax.block_until_ready(
        condense_attn(nodes2, adj2, w2, a2, mxu_dtype=jnp.float32,
                      fused_max_nodes=0, h_resident_max_bytes=0))
    check(out2, ref2, 3e-3, 3e-3, "tiled/f32/n200")

    # 3) Same graph on the default bf16 fused fast path.
    out3 = jax.block_until_ready(condense_attn(nodes2, adj2, w2, a2))
    check(out3, ref2, 5e-2, 5e-2, "fused/bf16/n200")

    # 4) Larger graph -> tiled path with generation-tuned tiles (256 on
    #    v6e/v7x) and fully-resident h, strict f32 parity.
    nodes4, adj4, w4, a4 = make_case(k3, 520, 64, 96, 0.05, 0.02)
    ref4 = reference_jax(nodes4, adj4, w4, a4)
    out4 = jax.block_until_ready(
        condense_attn(nodes4, adj4, w4, a4, mxu_dtype=jnp.float32,
                      fused_max_nodes=0))
    check(out4, ref4, 3e-3, 3e-3, "tiled/f32/n520")

    # 5) Same graph on the default bf16 tiled fast path (bf16 MXU + bf16 e).
    out5 = jax.block_until_ready(
        condense_attn(nodes4, adj4, w4, a4, fused_max_nodes=0))
    check(out5, ref4, 1e-1, 1e-1, "tiled/bf16/n520")

    print("KERNEL_OK")
</pallas_src>

<mosaic_0001>
module attributes {stable_mosaic.version = 11 : i64} {
  func.func @_fused_kernel(%arg0: i32, %arg1: memref<128x128xf32, #tpu.memory_space<vmem>>, %arg2: memref<128x256xf32, #tpu.memory_space<vmem>>, %arg3: memref<128x128xf32, #tpu.memory_space<vmem>>, %arg4: memref<128x128xf32, #tpu.memory_space<vmem>>) attributes {dimension_semantics = [#tpu.dimension_semantics<arbitrary>], iteration_bounds = array<i64: 1>, scalar_prefetch = 0 : i64, scratch_operands = 0 : i64, tpu.core_type = #tpu.core_type<tc>, window_params = [{pipeline_mode = #tpu.pipeline_mode<synchronous>, transform_indices = @transform_0, window_bounds = array<i64: 128, 128>}, {pipeline_mode = #tpu.pipeline_mode<synchronous>, transform_indices = @transform_1, window_bounds = array<i64: 128, 256>}, {pipeline_mode = #tpu.pipeline_mode<synchronous>, transform_indices = @transform_2, window_bounds = array<i64: 128, 128>}, {pipeline_mode = #tpu.pipeline_mode<synchronous>, transform_indices = @transform_3, window_bounds = array<i64: 128, 128>}]} {
    %c0 = arith.constant 0 : index
    %c0_0 = arith.constant 0 : index
    %0 = vector.load %arg1[%c0, %c0_0] : memref<128x128xf32, #tpu.memory_space<vmem>>, vector<128x128xf32>
    %c0_1 = arith.constant 0 : index
    %c0_2 = arith.constant 0 : index
    %1 = vector.load %arg2[%c0_1, %c0_2] : memref<128x256xf32, #tpu.memory_space<vmem>>, vector<128x256xf32>
    %cst = arith.constant dense<0.000000e+00> : vector<128x256xf32>
    %2 = tpu.matmul %0, %1, %cst {dimension_numbers = #tpu.dot_dimension_numbers<[1], [0], [0], [1], [0, 0, 1, 1], [], []>} : vector<128x128xf32>, vector<128x256xf32>, vector<128x256xf32> -> vector<128x256xf32>
    %3 = vector.extract_strided_slice %2 {offsets = [0, 0], sizes = [128, 128], strides = [1, 1]} : vector<128x256xf32> to vector<128x128xf32>
    %4 = vector.extract_strided_slice %2 {offsets = [0, 128], sizes = [128, 1], strides = [1, 1]} : vector<128x256xf32> to vector<128x1xf32>
    %5 = vector.extract_strided_slice %2 {offsets = [0, 129], sizes = [128, 1], strides = [1, 1]} : vector<128x256xf32> to vector<128x1xf32>
    %cst_3 = arith.constant 1.000000e+00 : f32
    %6 = vector.broadcast %cst_3 : f32 to vector<128x1xf32>
    %cst_4 = arith.constant dense<0.000000e+00> : vector<128x128xf32>
    %7 = tpu.matmul %6, %5, %cst_4 {dimension_numbers = #tpu.dot_dimension_numbers<[1], [1], [0], [0], [0, 0, 1, 0], [], []>} : vector<128x1xf32>, vector<128x1xf32>, vector<128x128xf32> -> vector<128x128xf32>
    %8 = vector.broadcast %4 : vector<128x1xf32> to vector<128x128xf32>
    %9 = arith.addf %8, %7 : vector<128x128xf32>
    %cst_5 = arith.constant 2.000000e-01 : f32
    %10 = vector.broadcast %cst_5 : f32 to vector<128x128xf32>
    %11 = arith.mulf %10, %9 : vector<128x128xf32>
    %12 = arith.maximumf %9, %11 : vector<128x128xf32>
    %c0_6 = arith.constant 0 : index
    %c0_7 = arith.constant 0 : index
    %13 = vector.load %arg3[%c0_6, %c0_7] : memref<128x128xf32, #tpu.memory_space<vmem>>, vector<128x128xf32>
    %cst_8 = arith.constant dense<0.000000e+00> : vector<128x128xf32>
    %14 = tpu.matmul %13, %12, %cst_8 {dimension_numbers = #tpu.dot_dimension_numbers<[1], [0], [0], [1], [0, 0, 1, 1], [], []>} : vector<128x128xf32>, vector<128x128xf32>, vector<128x128xf32> -> vector<128x128xf32>
    %cst_9 = arith.constant 5.000000e-01 : f32
    %15 = vector.broadcast %cst_9 : f32 to vector<128x128xf32>
    %16 = arith.cmpf oge, %13, %15 : vector<128x128xf32>
    %cst_10 = arith.constant -1.000000e+30 : f32
    %17 = vector.broadcast %cst_10 : f32 to vector<128x128xf32>
    %18 = arith.select %16, %14, %17 : vector<128x128xi1>, vector<128x128xf32>
    %cst_11 = arith.constant dense<0xFF800000> : vector<128xf32>
    %19 = vector.multi_reduction <maximumf>, %18, %cst_11 [1] : vector<128x128xf32> to vector<128xf32>
    %20 = vector.shape_cast %19 : vector<128xf32> to vector<128x1xf32>
    %21 = vector.broadcast %20 : vector<128x1xf32> to vector<128x128xf32>
    %22 = arith.subf %18, %21 : vector<128x128xf32>
    %23 = math.exp %22 : vector<128x128xf32>
    %cst_12 = arith.constant dense<0.000000e+00> : vector<128xf32>
    %24 = vector.multi_reduction <add>, %23, %cst_12 [1] : vector<128x128xf32> to vector<128xf32>
    %25 = vector.shape_cast %24 : vector<128xf32> to vector<128x1xf32>
    %cst_13 = arith.constant 1.000000e+00 : f32
    %26 = vector.broadcast %cst_13 : f32 to vector<128x1xf32>
    %27 = arith.divf %26, %25 : vector<128x1xf32>
    %28 = vector.broadcast %27 : vector<128x1xf32> to vector<128x128xf32>
    %29 = arith.mulf %23, %28 : vector<128x128xf32>
    %cst_14 = arith.constant dense<0.000000e+00> : vector<128x128xf32>
    %30 = tpu.matmul %29, %3, %cst_14 {dimension_numbers = #tpu.dot_dimension_numbers<[1], [0], [0], [1], [0, 0, 1, 1], [], []>} : vector<128x128xf32>, vector<128x128xf32>, vector<128x128xf32> -> vector<128x128xf32>
    %cst_15 = arith.constant 2.000000e-01 : f32
    %31 = vector.broadcast %cst_15 : f32 to vector<128x128xf32>
    %32 = arith.mulf %31, %30 : vector<128x128xf32>
    %33 = arith.maximumf %30, %32 : vector<128x128xf32>
    %c0_16 = arith.constant 0 : index
    %c0_17 = arith.constant 0 : index
    %34 = vector.load %arg4[%c0_16, %c0_17] : memref<128x128xf32, #tpu.memory_space<vmem>>, vector<128x128xf32>
    tpu.vector_store %arg4[%c0_16, %c0_17], %33 {strides = array<i32>} : memref<128x128xf32, #tpu.memory_space<vmem>>, vector<128x128xf32>,
    return
  }
  func.func @transform_0(%arg0: i32) -> (i32, i32) {
    %c0_i32 = arith.constant 0 : i32
    %c0_i32_0 = arith.constant 0 : i32
    %c0_i32_1 = arith.constant 0 : i32
    return %c0_i32, %c0_i32_0 : i32, i32
  }
  func.func @transform_1(%arg0: i32) -> (i32, i32) {
    %c0_i32 = arith.constant 0 : i32
    %c0_i32_0 = arith.constant 0 : i32
    %c0_i32_1 = arith.constant 0 : i32
    return %c0_i32, %c0_i32_0 : i32, i32
  }
  func.func @transform_2(%arg0: i32) -> (i32, i32) {
    %c0_i32 = arith.constant 0 : i32
    %c0_i32_0 = arith.constant 0 : i32
    %c0_i32_1 = arith.constant 0 : i32
    return %c0_i32, %c0_i32_0 : i32, i32
  }
  func.func @transform_3(%arg0: i32) -> (i32, i32) {
    %c0_i32 = arith.constant 0 : i32
    %c0_i32_0 = arith.constant 0 : i32
    %c0_i32_1 = arith.constant 0 : i32
    return %c0_i32, %c0_i32_0 : i32, i32
  }
}

module attributes {stable_mosaic.version = 11 : i64} {
  func.func @_proj_kernel(%arg0: i32, %arg1: memref<128x128xf32, #tpu.memory_space<vmem>>, %arg2: memref<128x256xf32, #tpu.memory_space<vmem>>, %arg3: memref<128x128xf32, #tpu.memory_space<vmem>>, %arg4: memref<128x128xf32, #tpu.memory_space<vmem>>) attributes {dimension_semantics = [#tpu.dimension_semantics<parallel>], iteration_bounds = array<i64: 1>, scalar_prefetch = 0 : i64, scratch_operands = 0 : i64, tpu.core_type = #tpu.core_type<tc>, window_params = [{transform_indices = @transform_0, window_bounds = array<i64: 128, 128>}, {pipeline_mode = #tpu.pipeline_mode<synchronous>, transform_indices = @transform_1, window_bounds = array<i64: 128, 256>}, {transform_indices = @transform_2, window_bounds = array<i64: 128, 128>}, {transform_indices = @transform_3, window_bounds = array<i64: 128, 128>}]} {
    %c0 = arith.constant 0 : index
    %c0_0 = arith.constant 0 : index
    %0 = vector.load %arg1[%c0, %c0_0] : memref<128x128xf32, #tpu.memory_space<vmem>>, vector<128x128xf32>
    %c0_1 = arith.constant 0 : index
    %c0_2 = arith.constant 0 : index
    %1 = vector.load %arg2[%c0_1, %c0_2] : memref<128x256xf32, #tpu.memory_space<vmem>>, vector<128x256xf32>
    %cst = arith.constant dense<0.000000e+00> : vector<128x256xf32>
    %2 = tpu.matmul %0, %1, %cst {dimension_numbers = #tpu.dot_dimension_numbers<[1], [0], [0], [1], [0, 0, 1, 1], [], []>} : vector<128x128xf32>, vector<128x256xf32>, vector<128x256xf32> -> vector<128x256xf32>
    %3 = vector.extract_strided_slice %2 {offsets = [0, 0], sizes = [128, 128], strides = [1, 1]} : vector<128x256xf32> to vector<128x128xf32>
    %c0_3 = arith.constant 0 : index
    %c0_4 = arith.constant 0 : index
    %4 = vector.load %arg3[%c0_3, %c0_4] : memref<128x128xf32, #tpu.memory_space<vmem>>, vector<128x128xf32>
    tpu.vector_store %arg3[%c0_3, %c0_4], %3 {strides = array<i32>} : memref<128x128xf32, #tpu.memory_space<vmem>>, vector<128x128xf32>,
    %5 = vector.extract_strided_slice %2 {offsets = [0, 128], sizes = [128, 128], strides = [1, 1]} : vector<128x256xf32> to vector<128x128xf32>
    %c0_5 = arith.constant 0 : index
    %c0_6 = arith.constant 0 : index
    %6 = vector.load %arg4[%c0_5, %c0_6] : memref<128x128xf32, #tpu.memory_space<vmem>>, vector<128x128xf32>
    tpu.vector_store %arg4[%c0_5, %c0_6], %5 {strides = array<i32>} : memref<128x128xf32, #tpu.memory_space<vmem>>, vector<128x128xf32>,
    return
  }
  func.func @transform_0(%arg0: i32) -> (i32, i32) {
    %c0_i32 = arith.constant 0 : i32
    %c0_i32_0 = arith.constant 0 : i32
    return %arg0, %c0_i32 : i32, i32
  }
  func.func @transform_1(%arg0: i32) -> (i32, i32) {
    %c0_i32 = arith.constant 0 : i32
    %c0_i32_0 = arith.constant 0 : i32
    %c0_i32_1 = arith.constant 0 : i32
    return %c0_i32, %c0_i32_0 : i32, i32
  }
  func.func @transform_2(%arg0: i32) -> (i32, i32) {
    %c0_i32 = arith.constant 0 : i32
    %c0_i32_0 = arith.constant 0 : i32
    return %arg0, %c0_i32 : i32, i32
  }
  func.func @transform_3(%arg0: i32) -> (i32, i32) {
    %c0_i32 = arith.constant 0 : i32
    %c0_i32_0 = arith.constant 0 : i32
    return %arg0, %c0_i32 : i32, i32
  }
}

</mosaic_0001>

<llo_original>
// kernel: tpu_custom_call.1
$region0: #{tpu_custom_call.1}
  #allocation0 [shape = 'u32[]', space=smem, size = 0x4, offset = 0x4, fixed_abs, tag = 'smem constant byte address 0x4 - core index']
  #allocation1 [shape = 'u32[144,128]{1,0:T(1,128)}', space=vmem, size = 0x12000, scoped, tag = 'internal scratch']
  %s0 = inlined_call_operand.hbm [shape: f32[128,128], index: 0, kind: input, shape index: {}]
  %s1 = inlined_call_operand.hbm [shape: f32[128,256], index: 1, kind: input, shape index: {}]
  %s2 = inlined_call_operand.hbm [shape: f32[128,128], index: 2, kind: input, shape index: {}]
  %s3 = inlined_call_operand.hbm [shape: f32[128,128], index: 3, kind: output, shape index: {}]
  %s4 = sld [smem:[#allocation0]]
  $region34: #{tpu_custom_call.1} parent=0
    _
  %s6 = ssub.s32 1, %s4
  %s7 = scalar_select 0, %s6, %s4
  $region1: #{tpu_custom_call.1} parent=0
    #allocation2 [shape = 'u8[65536]{0}', space=vmem, size = 0x10000, scoped, tag = 'input window, operand 0, single buffered']
    #allocation3 [shape = 's32[1]{0}', space=sflag, size = 0x4, scoped, tag = 'scoped memory for tpu_custom_call.1']
    #allocation4 [shape = 's32[1]{0}', space=sflag, size = 0x4, scoped, tag = 'scoped memory for tpu_custom_call.1']
    #allocation5 [shape = 'u8[131072]{0}', space=vmem, size = 0x20000, scoped, tag = 'input window, operand 1, single buffered']
    #allocation6 [shape = 's32[1]{0}', space=sflag, size = 0x4, scoped, tag = 'scoped memory for tpu_custom_call.1']
    #allocation7 [shape = 'u8[65536]{0}', space=vmem, size = 0x10000, scoped, tag = 'input window, operand 2, single buffered']
    #allocation8 [shape = 'u8[65536]{0}', space=vmem, size = 0x10000, scoped, tag = 'output window, operand 0, single buffered']
    %8 = vsyncpa [#allocation3], 0
    %9 = vsyncpa [#allocation6], 0
    %10 = vsyncpa [#allocation4], 0
    // Predicated region
    $region2: #{tpu_custom_call.1} parent=1 // pred_check
      _
    $region3: #{tpu_custom_call.1} parent=1 // pred_check_branch
      %12 = sbr.rel (0) target = $region5
    $region4: #{tpu_custom_call.1} parent=1 // pred_region
      %s14 = ssub.s32 2048, 2048
      %15 = vsyncadd [#allocation3], %s14
      %s16 = sshll.u32 [#allocation2], 4
      %s17 = int_to_ptr.vmem [resolvable:$true] %s16
      %22 = dma.hbm_to_vmem [thread:$0]  %s0, 2048, %s17, [#allocation3], 128, 128, 8
    $region5: #{tpu_custom_call.1} parent=1 // pred_fallthru
      _
    // Predicated region
    $region6: #{tpu_custom_call.1} parent=1 // pred_check
      _
    $region7: #{tpu_custom_call.1} parent=1 // pred_check_branch
      %24 = sbr.rel (0) target = $region9
    $region8: #{tpu_custom_call.1} parent=1 // pred_region
      %s26 = ssub.s32 4096, 4096
      %27 = vsyncadd [#allocation6], %s26
      %s28 = sshll.u32 [#allocation5], 4
      %s29 = int_to_ptr.vmem [resolvable:$true] %s28
      %34 = dma.hbm_to_vmem [thread:$0]  %s1, 4096, %s29, [#allocation6], 256, 256, 16
    $region9: #{tpu_custom_call.1} parent=1 // pred_fallthru
      _
    // Predicated region
    $region10: #{tpu_custom_call.1} parent=1 // pred_check
      _
    $region11: #{tpu_custom_call.1} parent=1 // pred_check_branch
      %36 = sbr.rel (0) target = $region13
    $region12: #{tpu_custom_call.1} parent=1 // pred_region
      %s38 = ssub.s32 2048, 2048
      %39 = vsyncadd [#allocation6], %s38
      %s40 = sshll.u32 [#allocation7], 4
      %s41 = int_to_ptr.vmem [resolvable:$true] %s40
      %46 = dma.hbm_to_vmem [thread:$0]  %s2, 2048, %s41, [#allocation6], 128, 128, 8
    $region13: #{tpu_custom_call.1} parent=1 // pred_fallthru
      _
    // Predicated region
    $region14: #{tpu_custom_call.1} parent=1 // pred_check
      _
    $region15: #{tpu_custom_call.1} parent=1 // pred_check_branch
      %48 = sbr.rel (0) target = $region17
    $region16: #{tpu_custom_call.1} parent=1 // pred_region
      %49 = dma.done [#allocation3], 2048
    $region17: #{tpu_custom_call.1} parent=1 // pred_fallthru
      _
    // Predicated region
    $region18: #{tpu_custom_call.1} parent=1 // pred_check
      _
    $region19: #{tpu_custom_call.1} parent=1 // pred_check_branch
      %51 = sbr.rel (0) target = $region21
    $region20: #{tpu_custom_call.1} parent=1 // pred_region
      %52 = dma.done [#allocation6], 4096
    $region21: #{tpu_custom_call.1} parent=1 // pred_fallthru
      _
    // Predicated region
    $region22: #{tpu_custom_call.1} parent=1 // pred_check
      _
    $region23: #{tpu_custom_call.1} parent=1 // pred_check_branch
      %54 = sbr.rel (0) target = $region25
    $region24: #{tpu_custom_call.1} parent=1 // pred_region
      %55 = dma.done [#allocation6], 2048
    $region25: #{tpu_custom_call.1} parent=1 // pred_fallthru
      _
    %v56 = vld [vmem:[#allocation2] sm:$0xff]
    %v57 = vld [vmem:[#allocation2 + $0x8] sm:$0xff]
    %v58 = vld [vmem:[#allocation2 + $0x10] sm:$0xff]
    %v59 = vld [vmem:[#allocation2 + $0x18] sm:$0xff]
    %v60 = vld [vmem:[#allocation2 + $0x20] sm:$0xff]
    %v61 = vld [vmem:[#allocation2 + $0x28] sm:$0xff]
    %v62 = vld [vmem:[#allocation2 + $0x30] sm:$0xff]
    %v63 = vld [vmem:[#allocation2 + $0x38] sm:$0xff]
    %v64 = vld [vmem:[#allocation2 + $0x40] sm:$0xff]
    %v65 = vld [vmem:[#allocation2 + $0x48] sm:$0xff]
    %v66 = vld [vmem:[#allocation2 + $0x50] sm:$0xff]
    %v67 = vld [vmem:[#allocation2 + $0x58] sm:$0xff]
    %v68 = vld [vmem:[#allocation2 + $0x60] sm:$0xff]
    %v69 = vld [vmem:[#allocation2 + $0x68] sm:$0xff]
    %v70 = vld [vmem:[#allocation2 + $0x70] sm:$0xff]
    %v71 = vld [vmem:[#allocation2 + $0x78] sm:$0xff]
    %v72 = vld [vmem:[#allocation5] sm:$0xff]
    %v73 = vld [vmem:[#allocation5 + $0x8] sm:$0xff]
    %v74 = vld [vmem:[#allocation5 + $0x10] sm:$0xff]
    %v75 = vld [vmem:[#allocation5 + $0x18] sm:$0xff]
    %v76 = vld [vmem:[#allocation5 + $0x20] sm:$0xff]
    %v77 = vld [vmem:[#allocation5 + $0x28] sm:$0xff]
    %v78 = vld [vmem:[#allocation5 + $0x30] sm:$0xff]
    %v79 = vld [vmem:[#allocation5 + $0x38] sm:$0xff]
    %v80 = vld [vmem:[#allocation5 + $0x40] sm:$0xff]
    %v81 = vld [vmem:[#allocation5 + $0x48] sm:$0xff]
    %v82 = vld [vmem:[#allocation5 + $0x50] sm:$0xff]
    %v83 = vld [vmem:[#allocation5 + $0x58] sm:$0xff]
    %v84 = vld [vmem:[#allocation5 + $0x60] sm:$0xff]
    %v85 = vld [vmem:[#allocation5 + $0x68] sm:$0xff]
    %v86 = vld [vmem:[#allocation5 + $0x70] sm:$0xff]
    %v87 = vld [vmem:[#allocation5 + $0x78] sm:$0xff]
    %v88 = vld [vmem:[#allocation5 + $0x80] sm:$0xff]
    %v89 = vld [vmem:[#allocation5 + $0x88] sm:$0xff]
    %v90 = vld [vmem:[#allocation5 + $0x90] sm:$0xff]
    %v91 = vld [vmem:[#allocation5 + $0x98] sm:$0xff]
    %v92 = vld [vmem:[#allocation5 + $0xa0] sm:$0xff]
    %v93 = vld [vmem:[#allocation5 + $0xa8] sm:$0xff]
    %v94 = vld [vmem:[#allocation5 + $0xb0] sm:$0xff]
    %v95 = vld [vmem:[#allocation5 + $0xb8] sm:$0xff]
    %v96 = vld [vmem:[#allocation5 + $0xc0] sm:$0xff]
    %v97 = vld [vmem:[#allocation5 + $0xc8] sm:$0xff]
    %v98 = vld [vmem:[#allocation5 + $0xd0] sm:$0xff]
    %v99 = vld [vmem:[#allocation5 + $0xd8] sm:$0xff]
    %v100 = vld [vmem:[#allocation5 + $0xe0] sm:$0xff]
    %v101 = vld [vmem:[#allocation5 + $0xe8] sm:$0xff]
    %v102 = vld [vmem:[#allocation5 + $0xf0] sm:$0xff]
    %v103 = vld [vmem:[#allocation5 + $0xf8] sm:$0xff]
    %104 = vmatprep.subr.mxu0 %v103
    %105 = vmatpush1.msra.mxu0 %v102
    %106 = vmatprep.subr.mxu0 %v101
    %107 = vmatpush1.msra.mxu0 %v100
    %108 = vmatprep.subr.mxu0 %v99
    %109 = vmatpush1.msra.mxu0 %v98
    %110 = vmatprep.subr.mxu0 %v97
    %111 = vmatpush1.msra.mxu0 %v96
    %112 = vmatprep.subr.mxu0 %v95
    %113 = vmatpush1.msra.mxu0 %v94
    %114 = vmatprep.subr.mxu0 %v93
    %115 = vmatpush1.msra.mxu0 %v92
    %116 = vmatprep.subr.mxu0 %v91
    %117 = vmatpush1.msra.mxu0 %v90
    %118 = vmatprep.subr.mxu0 %v89
    %119 = vmatpush1.msra.mxu0 %v88
    %120 = vmatprep.subr.mxu0 %v87
    %121 = vmatpush1.msra.mxu0 %v86
    %122 = vmatprep.subr.mxu0 %v85
    %123 = vmatpush1.msra.mxu0 %v84
    %124 = vmatprep.subr.mxu0 %v83
    %125 = vmatpush1.msra.mxu0 %v82
    %126 = vmatprep.subr.mxu0 %v81
    %127 = vmatpush1.msra.mxu0 %v80
    %128 = vmatprep.subr.mxu0 %v79
    %129 = vmatpush1.msra.mxu0 %v78
    %130 = vmatprep.subr.mxu0 %v77
    %131 = vmatpush1.msra.mxu0 %v76
    %132 = vmatprep.subr.mxu0 %v75
    %133 = vmatpush1.msra.mxu0 %v74
    %134 = vmatprep.subr.mxu0 %v73
    %135 = vmatpush1.msra.mxu0 %v72
    %136 = vmatprep.subr.mxu0 0.0
    %137 = vmatpush2.msra.mxu0 0.0
    %138 = vmatprep.subr.mxu0 0.0
    %139 = vmatpush2.msra.mxu0 0.0
    %140 = vmatprep.subr.mxu0 0.0
    %141 = vmatpush2.msra.mxu0 0.0
    %142 = vmatprep.subr.mxu0 0.0
    %143 = vmatpush2.msra.mxu0 0.0
    %144 = vmatprep.subr.mxu0 0.0
    %145 = vmatpush2.msra.mxu0 0.0
    %146 = vmatprep.subr.mxu0 0.0
    %147 = vmatpush2.msra.mxu0 0.0
    %148 = vmatprep.subr.mxu0 0.0
    %149 = vmatpush2.msra.mxu0 0.0
    %150 = vmatprep.subr.mxu0 0.0
    %151 = vmatpush2.msra.mxu0 0.0
    %152 = vmatprep.subr.mxu0 0.0
    %153 = vmatpush2.msra.mxu0 0.0
    %154 = vmatprep.subr.mxu0 0.0
    %155 = vmatpush2.msra.mxu0 0.0
    %156 = vmatprep.subr.mxu0 0.0
    %157 = vmatpush2.msra.mxu0 0.0
    %158 = vmatprep.subr.mxu0 0.0
    %159 = vmatpush2.msra.mxu0 0.0
    %160 = vmatprep.subr.mxu0 0.0
    %161 = vmatpush2.msra.mxu0 0.0
    %162 = vmatprep.subr.mxu0 0.0
    %163 = vmatpush2.msra.mxu0 0.0
    %164 = vmatprep.subr.mxu0 0.0
    %165 = vmatpush2.msra.mxu0 0.0
    %166 = vmatprep.subr.mxu0 0.0
    %167 = vmatpush2.msra.mxu0 0.0
    %168 = vmatprep.mubr.f32.mxu0 0.0
    %169 = vmatmul.mubr.f32.gmra.mxu0 %v56
    %v170 = vpop.f32.mrf.mxu0
    %v171 = vadd.f32 0.0, %v170
    %v172 = vpop.f32.mrf.mxu0
    %v173 = vadd.f32 0.0, %v172
    %174 = vmatprep.mubr.f32.mxu0 0.0
    %175 = vmatmul.mubr.f32.gmra.mxu0 %v57
    %v176 = vpop.f32.mrf.mxu0
    %v177 = vadd.f32 0.0, %v176
    %v178 = vpop.f32.mrf.mxu0
    %v179 = vadd.f32 0.0, %v178
    %180 = vmatprep.mubr.f32.mxu0 0.0
    %181 = vmatmul.mubr.f32.gmra.mxu0 %v58
    %v182 = vpop.f32.mrf.mxu0
    %v183 = vadd.f32 0.0, %v182
    %v184 = vpop.f32.mrf.mxu0
    %v185 = vadd.f32 0.0, %v184
    %186 = vmatprep.mubr.f32.mxu0 0.0
    %187 = vmatmul.mubr.f32.gmra.mxu0 %v59
    %v188 = vpop.f32.mrf.mxu0
    %v189 = vadd.f32 0.0, %v188
    %v190 = vpop.f32.mrf.mxu0
    %v191 = vadd.f32 0.0, %v190
    %192 = vmatprep.mubr.f32.mxu0 0.0
    %193 = vmatmul.mubr.f32.gmra.mxu0 %v60
    %v194 = vpop.f32.mrf.mxu0
    %v195 = vadd.f32 0.0, %v194
    %v196 = vpop.f32.mrf.mxu0
    %v197 = vadd.f32 0.0, %v196
    %198 = vmatprep.mubr.f32.mxu0 0.0
    %199 = vmatmul.mubr.f32.gmra.mxu0 %v61
    %v200 = vpop.f32.mrf.mxu0
    %v201 = vadd.f32 0.0, %v200
    %v202 = vpop.f32.mrf.mxu0
    %v203 = vadd.f32 0.0, %v202
    %204 = vmatprep.mubr.f32.mxu0 0.0
    %205 = vmatmul.mubr.f32.gmra.mxu0 %v62
    %v206 = vpop.f32.mrf.mxu0
    %v207 = vadd.f32 0.0, %v206
    %v208 = vpop.f32.mrf.mxu0
    %v209 = vadd.f32 0.0, %v208
    %210 = vmatprep.mubr.f32.mxu0 0.0
    %211 = vmatmul.mubr.f32.gmra.mxu0 %v63
    %v212 = vpop.f32.mrf.mxu0
    %v213 = vadd.f32 0.0, %v212
    %v214 = vpop.f32.mrf.mxu0
    %v215 = vadd.f32 0.0, %v214
    %216 = vmatprep.mubr.f32.mxu0 0.0
    %217 = vmatmul.mubr.f32.gmra.mxu0 %v64
    %v218 = vpop.f32.mrf.mxu0
    %v219 = vadd.f32 0.0, %v218
    %v220 = vpop.f32.mrf.mxu0
    %v221 = vadd.f32 0.0, %v220
    %222 = vmatprep.mubr.f32.mxu0 0.0
    %223 = vmatmul.mubr.f32.gmra.mxu0 %v65
    %v224 = vpop.f32.mrf.mxu0
    %v225 = vadd.f32 0.0, %v224
    %v226 = vpop.f32.mrf.mxu0
    %v227 = vadd.f32 0.0, %v226
    %228 = vmatprep.mubr.f32.mxu0 0.0
    %229 = vmatmul.mubr.f32.gmra.mxu0 %v66
    %v230 = vpop.f32.mrf.mxu0
    %v231 = vadd.f32 0.0, %v230
    %v232 = vpop.f32.mrf.mxu0
    %v233 = vadd.f32 0.0, %v232
    %234 = vmatprep.mubr.f32.mxu0 0.0
    %235 = vmatmul.mubr.f32.gmra.mxu0 %v67
    %v236 = vpop.f32.mrf.mxu0
    %v237 = vadd.f32 0.0, %v236
    %v238 = vpop.f32.mrf.mxu0
    %v239 = vadd.f32 0.0, %v238
    %240 = vmatprep.mubr.f32.mxu0 0.0
    %241 = vmatmul.mubr.f32.gmra.mxu0 %v68
    %v242 = vpop.f32.mrf.mxu0
    %v243 = vadd.f32 0.0, %v242
    %v244 = vpop.f32.mrf.mxu0
    %v245 = vadd.f32 0.0, %v244
    %246 = vmatprep.mubr.f32.mxu0 0.0
    %247 = vmatmul.mubr.f32.gmra.mxu0 %v69
    %v248 = vpop.f32.mrf.mxu0
    %v249 = vadd.f32 0.0, %v248
    %v250 = vpop.f32.mrf.mxu0
    %v251 = vadd.f32 0.0, %v250
    %252 = vmatprep.mubr.f32.mxu0 0.0
    %253 = vmatmul.mubr.f32.gmra.mxu0 %v70
    %v254 = vpop.f32.mrf.mxu0
    %v255 = vadd.f32 0.0, %v254
    %v256 = vpop.f32.mrf.mxu0
    %v257 = vadd.f32 0.0, %v256
    %258 = vmatprep.mubr.f32.mxu0 0.0
    %259 = vmatmul.mubr.f32.gmra.mxu0 %v71
    %v260 = vpop.f32.mrf.mxu0
    %v261 = vadd.f32 0.0, %v260
    %v262 = vpop.f32.mrf.mxu0
    %v263 = vadd.f32 0.0, %v262
    %264 = vdwg.mxu0
    %281 = vrot.lane.b32.xlu0 %v173, 127
    %v282 = vpop.permute.xlu0 %281
    %283 = vrot.lane.b32.xlu0 %v179, 127
    %v284 = vpop.permute.xlu0 %283
    %285 = vrot.lane.b32.xlu0 %v185, 127
    %v286 = vpop.permute.xlu0 %285
    %287 = vrot.lane.b32.xlu0 %v191, 127
    %v288 = vpop.permute.xlu0 %287
    %289 = vrot.lane.b32.xlu0 %v197, 127
    %v290 = vpop.permute.xlu0 %289
    %291 = vrot.lane.b32.xlu0 %v203, 127
    %v292 = vpop.permute.xlu0 %291
    %293 = vrot.lane.b32.xlu0 %v209, 127
    %v294 = vpop.permute.xlu0 %293
    %295 = vrot.lane.b32.xlu0 %v215, 127
    %v296 = vpop.permute.xlu0 %295
    %297 = vrot.lane.b32.xlu0 %v221, 127
    %v298 = vpop.permute.xlu0 %297
    %299 = vrot.lane.b32.xlu0 %v227, 127
    %v300 = vpop.permute.xlu0 %299
    %301 = vrot.lane.b32.xlu0 %v233, 127
    %v302 = vpop.permute.xlu0 %301
    %303 = vrot.lane.b32.xlu0 %v239, 127
    %v304 = vpop.permute.xlu0 %303
    %305 = vrot.lane.b32.xlu0 %v245, 127
    %v306 = vpop.permute.xlu0 %305
    %307 = vrot.lane.b32.xlu0 %v251, 127
    %v308 = vpop.permute.xlu0 %307
    %309 = vrot.lane.b32.xlu0 %v257, 127
    %v310 = vpop.permute.xlu0 %309
    %311 = vrot.lane.b32.xlu0 %v263, 127
    %v312 = vpop.permute.xlu0 %311
    %vm313 = vcmask 7168
    %v315 = vsel %vm313, 1.0, 0
    %v317 = vsel %vm313, %v282, 0
    %v319 = vsel %vm313, %v284, 0
    %v321 = vsel %vm313, %v286, 0
    %v323 = vsel %vm313, %v288, 0
    %v325 = vsel %vm313, %v290, 0
    %v327 = vsel %vm313, %v292, 0
    %v329 = vsel %vm313, %v294, 0
    %v331 = vsel %vm313, %v296, 0
    %v333 = vsel %vm313, %v298, 0
    %v335 = vsel %vm313, %v300, 0
    %v337 = vsel %vm313, %v302, 0
    %v339 = vsel %vm313, %v304, 0
    %v341 = vsel %vm313, %v306, 0
    %v343 = vsel %vm313, %v308, 0
    %v345 = vsel %vm313, %v310, 0
    %v347 = vsel %vm313, %v312, 0
    %349 = vmatprep.subr.mxu0 0.0
    %350 = vmatpush1.xpose.msra.mxu0 %v347
    %351 = vmatprep.subr.mxu0 0.0
    %352 = vmatpush1.xpose.msra.mxu0 %v345
    %353 = vmatprep.subr.mxu0 0.0
    %354 = vmatpush1.xpose.msra.mxu0 %v343
    %355 = vmatprep.subr.mxu0 0.0
    %356 = vmatpush1.xpose.msra.mxu0 %v341
    %357 = vmatprep.subr.mxu0 0.0
    %358 = vmatpush1.xpose.msra.mxu0 %v339
    %359 = vmatprep.subr.mxu0 0.0
    %360 = vmatpush1.xpose.msra.mxu0 %v337
    %361 = vmatprep.subr.mxu0 0.0
    %362 = vmatpush1.xpose.msra.mxu0 %v335
    %363 = vmatprep.subr.mxu0 0.0
    %364 = vmatpush1.xpose.msra.mxu0 %v333
    %365 = vmatprep.subr.mxu0 0.0
    %366 = vmatpush1.xpose.msra.mxu0 %v331
    %367 = vmatprep.subr.mxu0 0.0
    %368 = vmatpush1.xpose.msra.mxu0 %v329
    %369 = vmatprep.subr.mxu0 0.0
    %370 = vmatpush1.xpose.msra.mxu0 %v327
    %371 = vmatprep.subr.mxu0 0.0
    %372 = vmatpush1.xpose.msra.mxu0 %v325
    %373 = vmatprep.subr.mxu0 0.0
    %374 = vmatpush1.xpose.msra.mxu0 %v323
    %375 = vmatprep.subr.mxu0 0.0
    %376 = vmatpush1.xpose.msra.mxu0 %v321
    %377 = vmatprep.subr.mxu0 0.0
    %378 = vmatpush1.xpose.msra.mxu0 %v319
    %379 = vmatprep.subr.mxu0 0.0
    %380 = vmatpush1.xpose.msra.mxu0 %v317
    %381 = vmatprep.subr.mxu0 0.0
    %382 = vmatpush2.xpose.msra.mxu0 0.0
    %383 = vmatprep.subr.mxu0 0.0
    %384 = vmatpush2.xpose.msra.mxu0 0.0
    %385 = vmatprep.subr.mxu0 0.0
    %386 = vmatpush2.xpose.msra.mxu0 0.0
    %387 = vmatprep.subr.mxu0 0.0
    %388 = vmatpush2.xpose.msra.mxu0 0.0
    %389 = vmatprep.subr.mxu0 0.0
    %390 = vmatpush2.xpose.msra.mxu0 0.0
    %391 = vmatprep.subr.mxu0 0.0
    %392 = vmatpush2.xpose.msra.mxu0 0.0
    %393 = vmatprep.subr.mxu0 0.0
    %394 = vmatpush2.xpose.msra.mxu0 0.0
    %395 = vmatprep.subr.mxu0 0.0
    %396 = vmatpush2.xpose.msra.mxu0 0.0
    %397 = vmatprep.subr.mxu0 0.0
    %398 = vmatpush2.xpose.msra.mxu0 0.0
    %399 = vmatprep.subr.mxu0 0.0
    %400 = vmatpush2.xpose.msra.mxu0 0.0
    %401 = vmatprep.subr.mxu0 0.0
    %402 = vmatpush2.xpose.msra.mxu0 0.0
    %403 = vmatprep.subr.mxu0 0.0
    %404 = vmatpush2.xpose.msra.mxu0 0.0
    %405 = vmatprep.subr.mxu0 0.0
    %406 = vmatpush2.xpose.msra.mxu0 0.0
    %407 = vmatprep.subr.mxu0 0.0
    %408 = vmatpush2.xpose.msra.mxu0 0.0
    %409 = vmatprep.subr.mxu0 0.0
    %410 = vmatpush2.xpose.msra.mxu0 0.0
    %411 = vmatprep.subr.mxu0 0.0
    %412 = vmatpush2.xpose.msra.mxu0 0.0
    %413 = vmatprep.mubr.f32.mxu0 0.0
    %414 = vmatmul.mubr.f32.gmra.mxu0 %v315
    %v415 = vpop.f32.mrf.mxu0
    %v416 = vadd.f32 0.0, %v415
    %v417 = vpop.f32.mrf.mxu0
    %418 = vmatprep.mubr.f32.mxu0 0.0
    %419 = vmatmul.mubr.f32.gmra.mxu0 %v315
    %v420 = vpop.f32.mrf.mxu0
    %v421 = vadd.f32 0.0, %v420
    %v422 = vpop.f32.mrf.mxu0
    %423 = vmatprep.mubr.f32.mxu0 0.0
    %424 = vmatmul.mubr.f32.gmra.mxu0 %v315
    %v425 = vpop.f32.mrf.mxu0
    %v426 = vadd.f32 0.0, %v425
    %v427 = vpop.f32.mrf.mxu0
    %428 = vmatprep.mubr.f32.mxu0 0.0
    %429 = vmatmul.mubr.f32.gmra.mxu0 %v315
    %v430 = vpop.f32.mrf.mxu0
    %v431 = vadd.f32 0.0, %v430
    %v432 = vpop.f32.mrf.mxu0
    %433 = vmatprep.mubr.f32.mxu0 0.0
    %434 = vmatmul.mubr.f32.gmra.mxu0 %v315
    %v435 = vpop.f32.mrf.mxu0
    %v436 = vadd.f32 0.0, %v435
    %v437 = vpop.f32.mrf.mxu0
    %438 = vmatprep.mubr.f32.mxu0 0.0
    %439 = vmatmul.mubr.f32.gmra.mxu0 %v315
    %v440 = vpop.f32.mrf.mxu0
    %v441 = vadd.f32 0.0, %v440
    %v442 = vpop.f32.mrf.mxu0
    %443 = vmatprep.mubr.f32.mxu0 0.0
    %444 = vmatmul.mubr.f32.gmra.mxu0 %v315
    %v445 = vpop.f32.mrf.mxu0
    %v446 = vadd.f32 0.0, %v445
    %v447 = vpop.f32.mrf.mxu0
    %448 = vmatprep.mubr.f32.mxu0 0.0
    %449 = vmatmul.mubr.f32.gmra.mxu0 %v315
    %v450 = vpop.f32.mrf.mxu0
    %v451 = vadd.f32 0.0, %v450
    %v452 = vpop.f32.mrf.mxu0
    %453 = vmatprep.mubr.f32.mxu0 0.0
    %454 = vmatmul.mubr.f32.gmra.mxu0 %v315
    %v455 = vpop.f32.mrf.mxu0
    %v456 = vadd.f32 0.0, %v455
    %v457 = vpop.f32.mrf.mxu0
    %458 = vmatprep.mubr.f32.mxu0 0.0
    %459 = vmatmul.mubr.f32.gmra.mxu0 %v315
    %v460 = vpop.f32.mrf.mxu0
    %v461 = vadd.f32 0.0, %v460
    %v462 = vpop.f32.mrf.mxu0
    %463 = vmatprep.mubr.f32.mxu0 0.0
    %464 = vmatmul.mubr.f32.gmra.mxu0 %v315
    %v465 = vpop.f32.mrf.mxu0
    %v466 = vadd.f32 0.0, %v465
    %v467 = vpop.f32.mrf.mxu0
    %468 = vmatprep.mubr.f32.mxu0 0.0
    %469 = vmatmul.mubr.f32.gmra.mxu0 %v315
    %v470 = vpop.f32.mrf.mxu0
    %v471 = vadd.f32 0.0, %v470
    %v472 = vpop.f32.mrf.mxu0
    %473 = vmatprep.mubr.f32.mxu0 0.0
    %474 = vmatmul.mubr.f32.gmra.mxu0 %v315
    %v475 = vpop.f32.mrf.mxu0
    %v476 = vadd.f32 0.0, %v475
    %v477 = vpop.f32.mrf.mxu0
    %478 = vmatprep.mubr.f32.mxu0 0.0
    %479 = vmatmul.mubr.f32.gmra.mxu0 %v315
    %v480 = vpop.f32.mrf.mxu0
    %v481 = vadd.f32 0.0, %v480
    %v482 = vpop.f32.mrf.mxu0
    %483 = vmatprep.mubr.f32.mxu0 0.0
    %484 = vmatmul.mubr.f32.gmra.mxu0 %v315
    %v485 = vpop.f32.mrf.mxu0
    %v486 = vadd.f32 0.0, %v485
    %v487 = vpop.f32.mrf.mxu0
    %488 = vmatprep.mubr.f32.mxu0 0.0
    %489 = vmatmul.mubr.f32.gmra.mxu0 %v315
    %v490 = vpop.f32.mrf.mxu0
    %v491 = vadd.f32 0.0, %v490
    %v492 = vpop.f32.mrf.mxu0
    %493 = vdwg.mxu0
    %494 = vset.pattern.permute.xlu0 0
    %495 = vperm.xlu0 %494, %v173
    %v496 = vpop.permute.xlu0 %495
    %498 = vset.pattern.permute.xlu0 0
    %499 = vperm.xlu0 %498, %v179
    %v500 = vpop.permute.xlu0 %499
    %502 = vset.pattern.permute.xlu0 0
    %503 = vperm.xlu0 %502, %v185
    %v504 = vpop.permute.xlu0 %503
    %506 = vset.pattern.permute.xlu0 0
    %507 = vperm.xlu0 %506, %v191
    %v508 = vpop.permute.xlu0 %507
    %510 = vset.pattern.permute.xlu0 0
    %511 = vperm.xlu0 %510, %v197
    %v512 = vpop.permute.xlu0 %511
    %514 = vset.pattern.permute.xlu0 0
    %515 = vperm.xlu0 %514, %v203
    %v516 = vpop.permute.xlu0 %515
    %518 = vset.pattern.permute.xlu0 0
    %519 = vperm.xlu0 %518, %v209
    %v520 = vpop.permute.xlu0 %519
    %522 = vset.pattern.permute.xlu0 0
    %523 = vperm.xlu0 %522, %v215
    %v524 = vpop.permute.xlu0 %523
    %526 = vset.pattern.permute.xlu0 0
    %527 = vperm.xlu0 %526, %v221
    %v528 = vpop.permute.xlu0 %527
    %530 = vset.pattern.permute.xlu0 0
    %531 = vperm.xlu0 %530, %v227
    %v532 = vpop.permute.xlu0 %531
    %534 = vset.pattern.permute.xlu0 0
    %535 = vperm.xlu0 %534, %v233
    %v536 = vpop.permute.xlu0 %535
    %538 = vset.pattern.permute.xlu0 0
    %539 = vperm.xlu0 %538, %v239
    %v540 = vpop.permute.xlu0 %539
    %542 = vset.pattern.permute.xlu0 0
    %543 = vperm.xlu0 %542, %v245
    %v544 = vpop.permute.xlu0 %543
    %546 = vset.pattern.permute.xlu0 0
    %547 = vperm.xlu0 %546, %v251
    %v548 = vpop.permute.xlu0 %547
    %550 = vset.pattern.permute.xlu0 0
    %551 = vperm.xlu0 %550, %v257
    %v552 = vpop.permute.xlu0 %551
    %554 = vset.pattern.permute.xlu0 0
    %555 = vperm.xlu0 %554, %v263
    %v556 = vpop.permute.xlu0 %555
    %v558 = vadd.f32 %v496, %v416
    %v559 = vadd.f32 %v500, %v421
    %v560 = vadd.f32 %v504, %v426
    %v561 = vadd.f32 %v508, %v431
    %v562 = vadd.f32 %v512, %v436
    %v563 = vadd.f32 %v516, %v441
    %v564 = vadd.f32 %v520, %v446
    %v565 = vadd.f32 %v524, %v451
    %v566 = vadd.f32 %v528, %v456
    %v567 = vadd.f32 %v532, %v461
    %v568 = vadd.f32 %v536, %v466
    %v569 = vadd.f32 %v540, %v471
    %v570 = vadd.f32 %v544, %v476
    %v571 = vadd.f32 %v548, %v481
    %v572 = vadd.f32 %v552, %v486
    %v573 = vadd.f32 %v556, %v491
    %v574 = vmul.f32 %v558, 0.2
    %v575 = vmul.f32 %v559, 0.2
    %v576 = vmul.f32 %v560, 0.2
    %v577 = vmul.f32 %v561, 0.2
    %v578 = vmul.f32 %v562, 0.2
    %v579 = vmul.f32 %v563, 0.2
    %v580 = vmul.f32 %v564, 0.2
    %v581 = vmul.f32 %v565, 0.2
    %v582 = vmul.f32 %v566, 0.2
    %v583 = vmul.f32 %v567, 0.2
    %v584 = vmul.f32 %v568, 0.2
    %v585 = vmul.f32 %v569, 0.2
    %v586 = vmul.f32 %v570, 0.2
    %v587 = vmul.f32 %v571, 0.2
    %v588 = vmul.f32 %v572, 0.2
    %v589 = vmul.f32 %v573, 0.2
    %v590 = vmax.f32 %v558, %v574
    %v591 = vmax.f32 %v559, %v575
    %v592 = vmax.f32 %v560, %v576
    %v593 = vmax.f32 %v561, %v577
    %v594 = vmax.f32 %v562, %v578
    %v595 = vmax.f32 %v563, %v579
    %v596 = vmax.f32 %v564, %v580
    %v597 = vmax.f32 %v565, %v581
    %v598 = vmax.f32 %v566, %v582
    %v599 = vmax.f32 %v567, %v583
    %v600 = vmax.f32 %v568, %v584
    %v601 = vmax.f32 %v569, %v585
    %v602 = vmax.f32 %v570, %v586
    %v603 = vmax.f32 %v571, %v587
    %v604 = vmax.f32 %v572, %v588
    %v605 = vmax.f32 %v573, %v589
    %v606 = vld [vmem:[#allocation7] sm:$0xff]
    %v607 = vld [vmem:[#allocation7 + $0x8] sm:$0xff]
    %v608 = vld [vmem:[#allocation7 + $0x10] sm:$0xff]
    %v609 = vld [vmem:[#allocation7 + $0x18] sm:$0xff]
    %v610 = vld [vmem:[#allocation7 + $0x20] sm:$0xff]
    %v611 = vld [vmem:[#allocation7 + $0x28] sm:$0xff]
    %v612 = vld [vmem:[#allocation7 + $0x30] sm:$0xff]
    %v613 = vld [vmem:[#allocation7 + $0x38] sm:$0xff]
    %v614 = vld [vmem:[#allocation7 + $0x40] sm:$0xff]
    %v615 = vld [vmem:[#allocation7 + $0x48] sm:$0xff]
    %v616 = vld [vmem:[#allocation7 + $0x50] sm:$0xff]
    %v617 = vld [vmem:[#allocation7 + $0x58] sm:$0xff]
    %v618 = vld [vmem:[#allocation7 + $0x60] sm:$0xff]
    %v619 = vld [vmem:[#allocation7 + $0x68] sm:$0xff]
    %v620 = vld [vmem:[#allocation7 + $0x70] sm:$0xff]
    %v621 = vld [vmem:[#allocation7 + $0x78] sm:$0xff]
    %622 = vmatprep.subr.mxu0 0.0
    %623 = vmatpush1.msra.mxu0 %v605
    %624 = vmatprep.subr.mxu0 0.0
    %625 = vmatpush1.msra.mxu0 %v604
    %626 = vmatprep.subr.mxu0 0.0
    %627 = vmatpush1.msra.mxu0 %v603
    %628 = vmatprep.subr.mxu0 0.0
    %629 = vmatpush1.msra.mxu0 %v602
    %630 = vmatprep.subr.mxu0 0.0
    %631 = vmatpush1.msra.mxu0 %v601
    %632 = vmatprep.subr.mxu0 0.0
    %633 = vmatpush1.msra.mxu0 %v600
    %634 = vmatprep.subr.mxu0 0.0
    %635 = vmatpush1.msra.mxu0 %v599
    %636 = vmatprep.subr.mxu0 0.0
    %637 = vmatpush1.msra.mxu0 %v598
    %638 = vmatprep.subr.mxu0 0.0
    %639 = vmatpush1.msra.mxu0 %v597
    %640 = vmatprep.subr.mxu0 0.0
    %641 = vmatpush1.msra.mxu0 %v596
    %642 = vmatprep.subr.mxu0 0.0
    %643 = vmatpush1.msra.mxu0 %v595
    %644 = vmatprep.subr.mxu0 0.0
    %645 = vmatpush1.msra.mxu0 %v594
    %646 = vmatprep.subr.mxu0 0.0
    %647 = vmatpush1.msra.mxu0 %v593
    %648 = vmatprep.subr.mxu0 0.0
    %649 = vmatpush1.msra.mxu0 %v592
    %650 = vmatprep.subr.mxu0 0.0
    %651 = vmatpush1.msra.mxu0 %v591
    %652 = vmatprep.subr.mxu0 0.0
    %653 = vmatpush1.msra.mxu0 %v590
    %654 = vmatprep.subr.mxu0 0.0
    %655 = vmatpush2.msra.mxu0 0.0
    %656 = vmatprep.subr.mxu0 0.0
    %657 = vmatpush2.msra.mxu0 0.0
    %658 = vmatprep.subr.mxu0 0.0
    %659 = vmatpush2.msra.mxu0 0.0
    %660 = vmatprep.subr.mxu0 0.0
    %661 = vmatpush2.msra.mxu0 0.0
    %662 = vmatprep.subr.mxu0 0.0
    %663 = vmatpush2.msra.mxu0 0.0
    %664 = vmatprep.subr.mxu0 0.0
    %665 = vmatpush2.msra.mxu0 0.0
    %666 = vmatprep.subr.mxu0 0.0
    %667 = vmatpush2.msra.mxu0 0.0
    %668 = vmatprep.subr.mxu0 0.0
    %669 = vmatpush2.msra.mxu0 0.0
    %670 = vmatprep.subr.mxu0 0.0
    %671 = vmatpush2.msra.mxu0 0.0
    %672 = vmatprep.subr.mxu0 0.0
    %673 = vmatpush2.msra.mxu0 0.0
    %674 = vmatprep.subr.mxu0 0.0
    %675 = vmatpush2.msra.mxu0 0.0
    %676 = vmatprep.subr.mxu0 0.0
    %677 = vmatpush2.msra.mxu0 0.0
    %678 = vmatprep.subr.mxu0 0.0
    %679 = vmatpush2.msra.mxu0 0.0
    %680 = vmatprep.subr.mxu0 0.0
    %681 = vmatpush2.msra.mxu0 0.0
    %682 = vmatprep.subr.mxu0 0.0
    %683 = vmatpush2.msra.mxu0 0.0
    %684 = vmatprep.subr.mxu0 0.0
    %685 = vmatpush2.msra.mxu0 0.0
    %686 = vmatprep.mubr.f32.mxu0 0.0
    %687 = vmatmul.mubr.f32.gmra.mxu0 %v606
    %v688 = vpop.f32.mrf.mxu0
    %v689 = vadd.f32 0.0, %v688
    %v690 = vpop.f32.mrf.mxu0
    %691 = vmatprep.mubr.f32.mxu0 0.0
    %692 = vmatmul.mubr.f32.gmra.mxu0 %v607
    %v693 = vpop.f32.mrf.mxu0
    %v694 = vadd.f32 0.0, %v693
    %v695 = vpop.f32.mrf.mxu0
    %696 = vmatprep.mubr.f32.mxu0 0.0
    %697 = vmatmul.mubr.f32.gmra.mxu0 %v608
    %v698 = vpop.f32.mrf.mxu0
    %v699 = vadd.f32 0.0, %v698
    %v700 = vpop.f32.mrf.mxu0
    %701 = vmatprep.mubr.f32.mxu0 0.0
    %702 = vmatmul.mubr.f32.gmra.mxu0 %v609
    %v703 = vpop.f32.mrf.mxu0
    %v704 = vadd.f32 0.0, %v703
    %v705 = vpop.f32.mrf.mxu0
    %706 = vmatprep.mubr.f32.mxu0 0.0
    %707 = vmatmul.mubr.f32.gmra.mxu0 %v610
    %v708 = vpop.f32.mrf.mxu0
    %v709 = vadd.f32 0.0, %v708
    %v710 = vpop.f32.mrf.mxu0
    %711 = vmatprep.mubr.f32.mxu0 0.0
    %712 = vmatmul.mubr.f32.gmra.mxu0 %v611
    %v713 = vpop.f32.mrf.mxu0
    %v714 = vadd.f32 0.0, %v713
    %v715 = vpop.f32.mrf.mxu0
    %716 = vmatprep.mubr.f32.mxu0 0.0
    %717 = vmatmul.mubr.f32.gmra.mxu0 %v612
    %v718 = vpop.f32.mrf.mxu0
    %v719 = vadd.f32 0.0, %v718
    %v720 = vpop.f32.mrf.mxu0
    %721 = vmatprep.mubr.f32.mxu0 0.0
    %722 = vmatmul.mubr.f32.gmra.mxu0 %v613
    %v723 = vpop.f32.mrf.mxu0
    %v724 = vadd.f32 0.0, %v723
    %v725 = vpop.f32.mrf.mxu0
    %726 = vmatprep.mubr.f32.mxu0 0.0
    %727 = vmatmul.mubr.f32.gmra.mxu0 %v614
    %v728 = vpop.f32.mrf.mxu0
    %v729 = vadd.f32 0.0, %v728
    %v730 = vpop.f32.mrf.mxu0
    %731 = vmatprep.mubr.f32.mxu0 0.0
    %732 = vmatmul.mubr.f32.gmra.mxu0 %v615
    %v733 = vpop.f32.mrf.mxu0
    %v734 = vadd.f32 0.0, %v733
    %v735 = vpop.f32.mrf.mxu0
    %736 = vmatprep.mubr.f32.mxu0 0.0
    %737 = vmatmul.mubr.f32.gmra.mxu0 %v616
    %v738 = vpop.f32.mrf.mxu0
    %v739 = vadd.f32 0.0, %v738
    %v740 = vpop.f32.mrf.mxu0
    %741 = vmatprep.mubr.f32.mxu0 0.0
    %742 = vmatmul.mubr.f32.gmra.mxu0 %v617
    %v743 = vpop.f32.mrf.mxu0
    %v744 = vadd.f32 0.0, %v743
    %v745 = vpop.f32.mrf.mxu0
    %746 = vmatprep.mubr.f32.mxu0 0.0
    %747 = vmatmul.mubr.f32.gmra.mxu0 %v618
    %v748 = vpop.f32.mrf.mxu0
    %v749 = vadd.f32 0.0, %v748
    %v750 = vpop.f32.mrf.mxu0
    %751 = vmatprep.mubr.f32.mxu0 0.0
    %752 = vmatmul.mubr.f32.gmra.mxu0 %v619
    %v753 = vpop.f32.mrf.mxu0
    %v754 = vadd.f32 0.0, %v753
    %v755 = vpop.f32.mrf.mxu0
    %756 = vmatprep.mubr.f32.mxu0 0.0
    %757 = vmatmul.mubr.f32.gmra.mxu0 %v620
    %v758 = vpop.f32.mrf.mxu0
    %v759 = vadd.f32 0.0, %v758
    %v760 = vpop.f32.mrf.mxu0
    %761 = vmatprep.mubr.f32.mxu0 0.0
    %762 = vmatmul.mubr.f32.gmra.mxu0 %v621
    %v763 = vpop.f32.mrf.mxu0
    %v764 = vadd.f32 0.0, %v763
    %v765 = vpop.f32.mrf.mxu0
    %766 = vdwg.mxu0
    %vm767 = vcmp.ge.f32.partialorder %v606, 0.5
    %vm768 = vcmp.ge.f32.partialorder %v607, 0.5
    %vm769 = vcmp.ge.f32.partialorder %v608, 0.5
    %vm770 = vcmp.ge.f32.partialorder %v609, 0.5
    %vm771 = vcmp.ge.f32.partialorder %v610, 0.5
    %vm772 = vcmp.ge.f32.partialorder %v611, 0.5
    %vm773 = vcmp.ge.f32.partialorder %v612, 0.5
    %vm774 = vcmp.ge.f32.partialorder %v613, 0.5
    %vm775 = vcmp.ge.f32.partialorder %v614, 0.5
    %vm776 = vcmp.ge.f32.partialorder %v615, 0.5
    %vm777 = vcmp.ge.f32.partialorder %v616, 0.5
    %vm778 = vcmp.ge.f32.partialorder %v617, 0.5
    %vm779 = vcmp.ge.f32.partialorder %v618, 0.5
    %vm780 = vcmp.ge.f32.partialorder %v619, 0.5
    %vm781 = vcmp.ge.f32.partialorder %v620, 0.5
    %vm782 = vcmp.ge.f32.partialorder %v621, 0.5
    %v783 = vsel %vm767, %v689, -1e+30
    %v784 = vsel %vm768, %v694, -1e+30
    %v785 = vsel %vm769, %v699, -1e+30
    %v786 = vsel %vm770, %v704, -1e+30
    %v787 = vsel %vm771, %v709, -1e+30
    %v788 = vsel %vm772, %v714, -1e+30
    %v789 = vsel %vm773, %v719, -1e+30
    %v790 = vsel %vm774, %v724, -1e+30
    %v791 = vsel %vm775, %v729, -1e+30
    %v792 = vsel %vm776, %v734, -1e+30
    %v793 = vsel %vm777, %v739, -1e+30
    %v794 = vsel %vm778, %v744, -1e+30
    %v795 = vsel %vm779, %v749, -1e+30
    %v796 = vsel %vm780, %v754, -1e+30
    %v797 = vsel %vm781, %v759, -1e+30
    %v798 = vsel %vm782, %v764, -1e+30
    %799 = vmax.xlane.f32.xlu0 %v783
    %v800 = vpop.xlane.xlu0 %799
    %801 = vmax.xlane.f32.xlu0 %v784
    %v802 = vpop.xlane.xlu0 %801
    %803 = vmax.xlane.f32.xlu0 %v785
    %v804 = vpop.xlane.xlu0 %803
    %805 = vmax.xlane.f32.xlu0 %v786
    %v806 = vpop.xlane.xlu0 %805
    %807 = vmax.xlane.f32.xlu0 %v787
    %v808 = vpop.xlane.xlu0 %807
    %809 = vmax.xlane.f32.xlu0 %v788
    %v810 = vpop.xlane.xlu0 %809
    %811 = vmax.xlane.f32.xlu0 %v789
    %v812 = vpop.xlane.xlu0 %811
    %813 = vmax.xlane.f32.xlu0 %v790
    %v814 = vpop.xlane.xlu0 %813
    %815 = vmax.xlane.f32.xlu0 %v791
    %v816 = vpop.xlane.xlu0 %815
    %817 = vmax.xlane.f32.xlu0 %v792
    %v818 = vpop.xlane.xlu0 %817
    %819 = vmax.xlane.f32.xlu0 %v793
    %v820 = vpop.xlane.xlu0 %819
    %821 = vmax.xlane.f32.xlu0 %v794
    %v822 = vpop.xlane.xlu0 %821
    %823 = vmax.xlane.f32.xlu0 %v795
    %v824 = vpop.xlane.xlu0 %823
    %825 = vmax.xlane.f32.xlu0 %v796
    %v826 = vpop.xlane.xlu0 %825
    %827 = vmax.xlane.f32.xlu0 %v797
    %v828 = vpop.xlane.xlu0 %827
    %829 = vmax.xlane.f32.xlu0 %v798
    %v830 = vpop.xlane.xlu0 %829
    %v831 = vsub.f32 %v783, %v800
    %v832 = vsub.f32 %v784, %v802
    %v833 = vsub.f32 %v785, %v804
    %v834 = vsub.f32 %v786, %v806
    %v835 = vsub.f32 %v787, %v808
    %v836 = vsub.f32 %v788, %v810
    %v837 = vsub.f32 %v789, %v812
    %v838 = vsub.f32 %v790, %v814
    %v839 = vsub.f32 %v791, %v816
    %v840 = vsub.f32 %v792, %v818
    %v841 = vsub.f32 %v793, %v820
    %v842 = vsub.f32 %v794, %v822
    %v843 = vsub.f32 %v795, %v824
    %v844 = vsub.f32 %v796, %v826
    %v845 = vsub.f32 %v797, %v828
    %v846 = vsub.f32 %v798, %v830
    %v847 = vmul.f32 %v831, 1.442695
    %v848 = vpow.pop %v847
    %v849 = vmul.f32 %v832, 1.442695
    %v850 = vpow.pop %v849
    %v851 = vmul.f32 %v833, 1.442695
    %v852 = vpow.pop %v851
    %v853 = vmul.f32 %v834, 1.442695
    %v854 = vpow.pop %v853
    %v855 = vmul.f32 %v835, 1.442695
    %v856 = vpow.pop %v855
    %v857 = vmul.f32 %v836, 1.442695
    %v858 = vpow.pop %v857
    %v859 = vmul.f32 %v837, 1.442695
    %v860 = vpow.pop %v859
    %v861 = vmul.f32 %v838, 1.442695
    %v862 = vpow.pop %v861
    %v863 = vmul.f32 %v839, 1.442695
    %v864 = vpow.pop %v863
    %v865 = vmul.f32 %v840, 1.442695
    %v866 = vpow.pop %v865
    %v867 = vmul.f32 %v841, 1.442695
    %v868 = vpow.pop %v867
    %v869 = vmul.f32 %v842, 1.442695
    %v870 = vpow.pop %v869
    %v871 = vmul.f32 %v843, 1.442695
    %v872 = vpow.pop %v871
    %v873 = vmul.f32 %v844, 1.442695
    %v874 = vpow.pop %v873
    %v875 = vmul.f32 %v845, 1.442695
    %v876 = vpow.pop %v875
    %v877 = vmul.f32 %v846, 1.442695
    %v878 = vpow.pop %v877
    %879 = vadd.xlane.f32.xlu0 %v848
    %v880 = vpop.xlane.xlu0 %879
    %881 = vadd.xlane.f32.xlu0 %v850
    %v882 = vpop.xlane.xlu0 %881
    %883 = vadd.xlane.f32.xlu0 %v852
    %v884 = vpop.xlane.xlu0 %883
    %885 = vadd.xlane.f32.xlu0 %v854
    %v886 = vpop.xlane.xlu0 %885
    %887 = vadd.xlane.f32.xlu0 %v856
    %v888 = vpop.xlane.xlu0 %887
    %889 = vadd.xlane.f32.xlu0 %v858
    %v890 = vpop.xlane.xlu0 %889
    %891 = vadd.xlane.f32.xlu0 %v860
    %v892 = vpop.xlane.xlu0 %891
    %893 = vadd.xlane.f32.xlu0 %v862
    %v894 = vpop.xlane.xlu0 %893
    %895 = vadd.xlane.f32.xlu0 %v864
    %v896 = vpop.xlane.xlu0 %895
    %897 = vadd.xlane.f32.xlu0 %v866
    %v898 = vpop.xlane.xlu0 %897
    %899 = vadd.xlane.f32.xlu0 %v868
    %v900 = vpop.xlane.xlu0 %899
    %901 = vadd.xlane.f32.xlu0 %v870
    %v902 = vpop.xlane.xlu0 %901
    %903 = vadd.xlane.f32.xlu0 %v872
    %v904 = vpop.xlane.xlu0 %903
    %905 = vadd.xlane.f32.xlu0 %v874
    %v906 = vpop.xlane.xlu0 %905
    %907 = vadd.xlane.f32.xlu0 %v876
    %v908 = vpop.xlane.xlu0 %907
    %909 = vadd.xlane.f32.xlu0 %v878
    %v910 = vpop.xlane.xlu0 %909
    %v911 = vrcp.pop %v880
    %v912 = vmul.f32 1.0, %v911
    %v913 = vrcp.pop %v882
    %v914 = vmul.f32 1.0, %v913
    %v915 = vrcp.pop %v884
    %v916 = vmul.f32 1.0, %v915
    %v917 = vrcp.pop %v886
    %v918 = vmul.f32 1.0, %v917
    %v919 = vrcp.pop %v888
    %v920 = vmul.f32 1.0, %v919
    %v921 = vrcp.pop %v890
    %v922 = vmul.f32 1.0, %v921
    %v923 = vrcp.pop %v892
    %v924 = vmul.f32 1.0, %v923
    %v925 = vrcp.pop %v894
    %v926 = vmul.f32 1.0, %v925
    %v927 = vrcp.pop %v896
    %v928 = vmul.f32 1.0, %v927
    %v929 = vrcp.pop %v898
    %v930 = vmul.f32 1.0, %v929
    %v931 = vrcp.pop %v900
    %v932 = vmul.f32 1.0, %v931
    %v933 = vrcp.pop %v902
    %v934 = vmul.f32 1.0, %v933
    %v935 = vrcp.pop %v904
    %v936 = vmul.f32 1.0, %v935
    %v937 = vrcp.pop %v906
    %v938 = vmul.f32 1.0, %v937
    %v939 = vrcp.pop %v908
    %v940 = vmul.f32 1.0, %v939
    %v941 = vrcp.pop %v910
    %v942 = vmul.f32 1.0, %v941
    %v943 = vmul.f32 %v848, %v912
    %v944 = vmul.f32 %v850, %v914
    %v945 = vmul.f32 %v852, %v916
    %v946 = vmul.f32 %v854, %v918
    %v947 = vmul.f32 %v856, %v920
    %v948 = vmul.f32 %v858, %v922
    %v949 = vmul.f32 %v860, %v924
    %v950 = vmul.f32 %v862, %v926
    %v951 = vmul.f32 %v864, %v928
    %v952 = vmul.f32 %v866, %v930
    %v953 = vmul.f32 %v868, %v932
    %v954 = vmul.f32 %v870, %v934
    %v955 = vmul.f32 %v872, %v936
    %v956 = vmul.f32 %v874, %v938
    %v957 = vmul.f32 %v876, %v940
    %v958 = vmul.f32 %v878, %v942
    %959 = vmatprep.subr.mxu0 0.0
    %960 = vmatpush1.msra.mxu0 %v261
    %961 = vmatprep.subr.mxu0 0.0
    %962 = vmatpush1.msra.mxu0 %v255
    %963 = vmatprep.subr.mxu0 0.0
    %964 = vmatpush1.msra.mxu0 %v249
    %965 = vmatprep.subr.mxu0 0.0
    %966 = vmatpush1.msra.mxu0 %v243
    %967 = vmatprep.subr.mxu0 0.0
    %968 = vmatpush1.msra.mxu0 %v237
    %969 = vmatprep.subr.mxu0 0.0
    %970 = vmatpush1.msra.mxu0 %v231
    %971 = vmatprep.subr.mxu0 0.0
    %972 = vmatpush1.msra.mxu0 %v225
    %973 = vmatprep.subr.mxu0 0.0
    %974 = vmatpush1.msra.mxu0 %v219
    %975 = vmatprep.subr.mxu0 0.0
    %976 = vmatpush1.msra.mxu0 %v213
    %977 = vmatprep.subr.mxu0 0.0
    %978 = vmatpush1.msra.mxu0 %v207
    %979 = vmatprep.subr.mxu0 0.0
    %980 = vmatpush1.msra.mxu0 %v201
    %981 = vmatprep.subr.mxu0 0.0
    %982 = vmatpush1.msra.mxu0 %v195
    %983 = vmatprep.subr.mxu0 0.0
    %984 = vmatpush1.msra.mxu0 %v189
    %985 = vmatprep.subr.mxu0 0.0
    %986 = vmatpush1.msra.mxu0 %v183
    %987 = vmatprep.subr.mxu0 0.0
    %988 = vmatpush1.msra.mxu0 %v177
    %989 = vmatprep.subr.mxu0 0.0
    %990 = vmatpush1.msra.mxu0 %v171
    %991 = vmatprep.subr.mxu0 0.0
    %992 = vmatpush2.msra.mxu0 0.0
    %993 = vmatprep.subr.mxu0 0.0
    %994 = vmatpush2.msra.mxu0 0.0
    %995 = vmatprep.subr.mxu0 0.0
    %996 = vmatpush2.msra.mxu0 0.0
    %997 = vmatprep.subr.mxu0 0.0
    %998 = vmatpush2.msra.mxu0 0.0
    %999 = vmatprep.subr.mxu0 0.0
    %1000 = vmatpush2.msra.mxu0 0.0
    %1001 = vmatprep.subr.mxu0 0.0
    %1002 = vmatpush2.msra.mxu0 0.0
    %1003 = vmatprep.subr.mxu0 0.0
    %1004 = vmatpush2.msra.mxu0 0.0
    %1005 = vmatprep.subr.mxu0 0.0
    %1006 = vmatpush2.msra.mxu0 0.0
    %1007 = vmatprep.subr.mxu0 0.0
    %1008 = vmatpush2.msra.mxu0 0.0
    %1009 = vmatprep.subr.mxu0 0.0
    %1010 = vmatpush2.msra.mxu0 0.0
    %1011 = vmatprep.subr.mxu0 0.0
    %1012 = vmatpush2.msra.mxu0 0.0
    %1013 = vmatprep.subr.mxu0 0.0
    %1014 = vmatpush2.msra.mxu0 0.0
    %1015 = vmatprep.subr.mxu0 0.0
    %1016 = vmatpush2.msra.mxu0 0.0
    %1017 = vmatprep.subr.mxu0 0.0
    %1018 = vmatpush2.msra.mxu0 0.0
    %1019 = vmatprep.subr.mxu0 0.0
    %1020 = vmatpush2.msra.mxu0 0.0
    %1021 = vmatprep.subr.mxu0 0.0
    %1022 = vmatpush2.msra.mxu0 0.0
    %1023 = vmatprep.mubr.f32.mxu0 0.0
    %1024 = vmatmul.mubr.f32.gmra.mxu0 %v943
    %v1025 = vpop.f32.mrf.mxu0
    %v1026 = vadd.f32 0.0, %v1025
    %v1027 = vpop.f32.mrf.mxu0
    %1028 = vmatprep.mubr.f32.mxu0 0.0
    %1029 = vmatmul.mubr.f32.gmra.mxu0 %v944
    %v1030 = vpop.f32.mrf.mxu0
    %v1031 = vadd.f32 0.0, %v1030
    %v1032 = vpop.f32.mrf.mxu0
    %1033 = vmatprep.mubr.f32.mxu0 0.0
    %1034 = vmatmul.mubr.f32.gmra.mxu0 %v945
    %v1035 = vpop.f32.mrf.mxu0
    %v1036 = vadd.f32 0.0, %v1035
    %v1037 = vpop.f32.mrf.mxu0
    %1038 = vmatprep.mubr.f32.mxu0 0.0
    %1039 = vmatmul.mubr.f32.gmra.mxu0 %v946
    %v1040 = vpop.f32.mrf.mxu0
    %v1041 = vadd.f32 0.0, %v1040
    %v1042 = vpop.f32.mrf.mxu0
    %1043 = vmatprep.mubr.f32.mxu0 0.0
    %1044 = vmatmul.mubr.f32.gmra.mxu0 %v947
    %v1045 = vpop.f32.mrf.mxu0
    %v1046 = vadd.f32 0.0, %v1045
    %v1047 = vpop.f32.mrf.mxu0
    %1048 = vmatprep.mubr.f32.mxu0 0.0
    %1049 = vmatmul.mubr.f32.gmra.mxu0 %v948
    %v1050 = vpop.f32.mrf.mxu0
    %v1051 = vadd.f32 0.0, %v1050
    %v1052 = vpop.f32.mrf.mxu0
    %1053 = vmatprep.mubr.f32.mxu0 0.0
    %1054 = vmatmul.mubr.f32.gmra.mxu0 %v949
    %v1055 = vpop.f32.mrf.mxu0
    %v1056 = vadd.f32 0.0, %v1055
    %v1057 = vpop.f32.mrf.mxu0
    %1058 = vmatprep.mubr.f32.mxu0 0.0
    %1059 = vmatmul.mubr.f32.gmra.mxu0 %v950
    %v1060 = vpop.f32.mrf.mxu0
    %v1061 = vadd.f32 0.0, %v1060
    %v1062 = vpop.f32.mrf.mxu0
    %1063 = vmatprep.mubr.f32.mxu0 0.0
    %1064 = vmatmul.mubr.f32.gmra.mxu0 %v951
    %v1065 = vpop.f32.mrf.mxu0
    %v1066 = vadd.f32 0.0, %v1065
    %v1067 = vpop.f32.mrf.mxu0
    %1068 = vmatprep.mubr.f32.mxu0 0.0
    %1069 = vmatmul.mubr.f32.gmra.mxu0 %v952
    %v1070 = vpop.f32.mrf.mxu0
    %v1071 = vadd.f32 0.0, %v1070
    %v1072 = vpop.f32.mrf.mxu0
    %1073 = vmatprep.mubr.f32.mxu0 0.0
    %1074 = vmatmul.mubr.f32.gmra.mxu0 %v953
    %v1075 = vpop.f32.mrf.mxu0
    %v1076 = vadd.f32 0.0, %v1075
    %v1077 = vpop.f32.mrf.mxu0
    %1078 = vmatprep.mubr.f32.mxu0 0.0
    %1079 = vmatmul.mubr.f32.gmra.mxu0 %v954
    %v1080 = vpop.f32.mrf.mxu0
    %v1081 = vadd.f32 0.0, %v1080
    %v1082 = vpop.f32.mrf.mxu0
    %1083 = vmatprep.mubr.f32.mxu0 0.0
    %1084 = vmatmul.mubr.f32.gmra.mxu0 %v955
    %v1085 = vpop.f32.mrf.mxu0
    %v1086 = vadd.f32 0.0, %v1085
    %v1087 = vpop.f32.mrf.mxu0
    %1088 = vmatprep.mubr.f32.mxu0 0.0
    %1089 = vmatmul.mubr.f32.gmra.mxu0 %v956
    %v1090 = vpop.f32.mrf.mxu0
    %v1091 = vadd.f32 0.0, %v1090
    %v1092 = vpop.f32.mrf.mxu0
    %1093 = vmatprep.mubr.f32.mxu0 0.0
    %1094 = vmatmul.mubr.f32.gmra.mxu0 %v957
    %v1095 = vpop.f32.mrf.mxu0
    %v1096 = vadd.f32 0.0, %v1095
    %v1097 = vpop.f32.mrf.mxu0
    %1098 = vmatprep.mubr.f32.mxu0 0.0
    %1099 = vmatmul.mubr.f32.gmra.mxu0 %v958
    %v1100 = vpop.f32.mrf.mxu0
    %v1101 = vadd.f32 0.0, %v1100
    %v1102 = vpop.f32.mrf.mxu0
    %1103 = vdwg.mxu0
    %v1104 = vmul.f32 %v1026, 0.2
    %v1105 = vmul.f32 %v1031, 0.2
    %v1106 = vmul.f32 %v1036, 0.2
    %v1107 = vmul.f32 %v1041, 0.2
    %v1108 = vmul.f32 %v1046, 0.2
    %v1109 = vmul.f32 %v1051, 0.2
    %v1110 = vmul.f32 %v1056, 0.2
    %v1111 = vmul.f32 %v1061, 0.2
    %v1112 = vmul.f32 %v1066, 0.2
    %v1113 = vmul.f32 %v1071, 0.2
    %v1114 = vmul.f32 %v1076, 0.2
    %v1115 = vmul.f32 %v1081, 0.2
    %v1116 = vmul.f32 %v1086, 0.2
    %v1117 = vmul.f32 %v1091, 0.2
    %v1118 = vmul.f32 %v1096, 0.2
    %v1119 = vmul.f32 %v1101, 0.2
    %v1120 = vmax.f32 %v1026, %v1104
    %v1121 = vmax.f32 %v1031, %v1105
    %v1122 = vmax.f32 %v1036, %v1106
    %v1123 = vmax.f32 %v1041, %v1107
    %v1124 = vmax.f32 %v1046, %v1108
    %v1125 = vmax.f32 %v1051, %v1109
    %v1126 = vmax.f32 %v1056, %v1110
    %v1127 = vmax.f32 %v1061, %v1111
    %v1128 = vmax.f32 %v1066, %v1112
    %v1129 = vmax.f32 %v1071, %v1113
    %v1130 = vmax.f32 %v1076, %v1114
    %v1131 = vmax.f32 %v1081, %v1115
    %v1132 = vmax.f32 %v1086, %v1116
    %v1133 = vmax.f32 %v1091, %v1117
    %v1134 = vmax.f32 %v1096, %v1118
    %v1135 = vmax.f32 %v1101, %v1119
    %1136 = vst [vmem:[#allocation8] sm:$0xff] %v1120
    %1137 = vst [vmem:[#allocation8 + $0x8] sm:$0xff] %v1121
    %1138 = vst [vmem:[#allocation8 + $0x10] sm:$0xff] %v1122
    %1139 = vst [vmem:[#allocation8 + $0x18] sm:$0xff] %v1123
    %1140 = vst [vmem:[#allocation8 + $0x20] sm:$0xff] %v1124
    %1141 = vst [vmem:[#allocation8 + $0x28] sm:$0xff] %v1125
    %1142 = vst [vmem:[#allocation8 + $0x30] sm:$0xff] %v1126
    %1143 = vst [vmem:[#allocation8 + $0x38] sm:$0xff] %v1127
    %1144 = vst [vmem:[#allocation8 + $0x40] sm:$0xff] %v1128
    %1145 = vst [vmem:[#allocation8 + $0x48] sm:$0xff] %v1129
    %1146 = vst [vmem:[#allocation8 + $0x50] sm:$0xff] %v1130
    %1147 = vst [vmem:[#allocation8 + $0x58] sm:$0xff] %v1131
    %1148 = vst [vmem:[#allocation8 + $0x60] sm:$0xff] %v1132
    %1149 = vst [vmem:[#allocation8 + $0x68] sm:$0xff] %v1133
    %1150 = vst [vmem:[#allocation8 + $0x70] sm:$0xff] %v1134
    %1151 = vst [vmem:[#allocation8 + $0x78] sm:$0xff] %v1135
    // Predicated region
    $region26: #{tpu_custom_call.1} parent=1 // pred_check
      _
    $region27: #{tpu_custom_call.1} parent=1 // pred_check_branch
      %1153 = sbr.rel (0) target = $region29
    $region28: #{tpu_custom_call.1} parent=1 // pred_region
      %s1155 = ssub.s32 2048, 2048
      %1156 = vsyncadd [#allocation4], %s1155
      %s1157 = sshll.u32 [#allocation8], 4
      %s1158 = int_to_ptr.vmem [resolvable:$true] %s1157
      %1163 = dma.vmem_to_hbm [thread:$0]  %s1158, 2048, %s3, [#allocation4], 128, 128, 8
    $region29: #{tpu_custom_call.1} parent=1 // pred_fallthru
      _
    // Predicated region
    $region30: #{tpu_custom_call.1} parent=1 // pred_check
      _
    $region31: #{tpu_custom_call.1} parent=1 // pred_check_branch
      %1165 = sbr.rel (0) target = $region33
    $region32: #{tpu_custom_call.1} parent=1 // pred_region
      %1166 = dma.done [#allocation4], 2048
    $region33: #{tpu_custom_call.1} parent=1 // pred_fallthru
      _
    %1167 = vsyncpa [#allocation3], 1
    %1168 = vsyncpa [#allocation6], 1
    %1169 = vsyncpa [#allocation4], 1

// kernel: tpu_custom_call.1
$region0: #{tpu_custom_call.1}
  #allocation0 [shape = 'u32[]', space=smem, size = 0x4, offset = 0x4, fixed_abs, tag = 'smem constant byte address 0x4 - core index']
  #allocation1 [shape = 'u32[144,128]{1,0:T(1,128)}', space=vmem, size = 0x12000, scoped, tag = 'internal scratch']
  %s0 = inlined_call_operand.hbm [shape: f32[128,128], index: 0, kind: input, shape index: {}]
  %s1 = inlined_call_operand.hbm [shape: f32[128,256], index: 1, kind: input, shape index: {}]
  %s2 = inlined_call_operand.hbm [shape: f32[128,128], index: 2, kind: output, shape index: {0}]
  %s3 = inlined_call_operand.hbm [shape: f32[128,128], index: 3, kind: output, shape index: {1}]
  %4 = xla_tuple %s2, %s3
  %s5 = sld [smem:[#allocation0]]
  $region34: #{tpu_custom_call.1} parent=0
    _
  %s7 = ssub.s32 1, %s5
  %s8 = scalar_select 0, %s7, %s5
  $region1: #{tpu_custom_call.1} parent=0
    #allocation2 [shape = 'u8[65536]{0}', space=vmem, size = 0x10000, scoped, tag = 'input window, operand 0, single buffered']
    #allocation3 [shape = 's32[1]{0}', space=sflag, size = 0x4, scoped, tag = 'scoped memory for tpu_custom_call.1']
    #allocation4 [shape = 's32[1]{0}', space=sflag, size = 0x4, scoped, tag = 'scoped memory for tpu_custom_call.1']
    #allocation5 [shape = 'u8[131072]{0}', space=vmem, size = 0x20000, scoped, tag = 'input window, operand 1, single buffered']
    #allocation6 [shape = 's32[1]{0}', space=sflag, size = 0x4, scoped, tag = 'scoped memory for tpu_custom_call.1']
    #allocation7 [shape = 'u8[65536]{0}', space=vmem, size = 0x10000, scoped, tag = 'output window, operand 0, single buffered']
    #allocation8 [shape = 'u8[65536]{0}', space=vmem, size = 0x10000, scoped, tag = 'output window, operand 1, single buffered']
    #allocation9 [shape = 's32[1]{0}', space=sflag, size = 0x4, scoped, tag = 'scoped memory for tpu_custom_call.1']
    %9 = vsyncpa [#allocation3], 0
    %10 = vsyncpa [#allocation6], 0
    %11 = vsyncpa [#allocation4], 0
    %12 = vsyncpa [#allocation9], 0
    // Predicated region
    $region2: #{tpu_custom_call.1} parent=1 // pred_check
      _
    $region3: #{tpu_custom_call.1} parent=1 // pred_check_branch
      %14 = sbr.rel (0) target = $region5
    $region4: #{tpu_custom_call.1} parent=1 // pred_region
      %s16 = ssub.s32 2048, 2048
      %17 = vsyncadd [#allocation3], %s16
      %s18 = sshll.u32 [#allocation2], 4
      %s19 = int_to_ptr.vmem [resolvable:$true] %s18
      %24 = dma.hbm_to_vmem [thread:$0]  %s0, 2048, %s19, [#allocation3], 128, 128, 8
    $region5: #{tpu_custom_call.1} parent=1 // pred_fallthru
      _
    // Predicated region
    $region6: #{tpu_custom_call.1} parent=1 // pred_check
      _
    $region7: #{tpu_custom_call.1} parent=1 // pred_check_branch
      %26 = sbr.rel (0) target = $region9
    $region8: #{tpu_custom_call.1} parent=1 // pred_region
      %s28 = ssub.s32 4096, 4096
      %29 = vsyncadd [#allocation6], %s28
      %s30 = sshll.u32 [#allocation5], 4
      %s31 = int_to_ptr.vmem [resolvable:$true] %s30
      %36 = dma.hbm_to_vmem [thread:$0]  %s1, 4096, %s31, [#allocation6], 256, 256, 16
    $region9: #{tpu_custom_call.1} parent=1 // pred_fallthru
      _
    // Predicated region
    $region10: #{tpu_custom_call.1} parent=1 // pred_check
      _
    $region11: #{tpu_custom_call.1} parent=1 // pred_check_branch
      %38 = sbr.rel (0) target = $region13
    $region12: #{tpu_custom_call.1} parent=1 // pred_region
      %39 = dma.done [#allocation3], 2048
    $region13: #{tpu_custom_call.1} parent=1 // pred_fallthru
      _
    // Predicated region
    $region14: #{tpu_custom_call.1} parent=1 // pred_check
      _
    $region15: #{tpu_custom_call.1} parent=1 // pred_check_branch
      %41 = sbr.rel (0) target = $region17
    $region16: #{tpu_custom_call.1} parent=1 // pred_region
      %42 = dma.done [#allocation6], 4096
    $region17: #{tpu_custom_call.1} parent=1 // pred_fallthru
      _
    %v43 = vld [vmem:[#allocation2] sm:$0xff]
    %v44 = vld [vmem:[#allocation2 + $0x8] sm:$0xff]
    %v45 = vld [vmem:[#allocation2 + $0x10] sm:$0xff]
    %v46 = vld [vmem:[#allocation2 + $0x18] sm:$0xff]
    %v47 = vld [vmem:[#allocation2 + $0x20] sm:$0xff]
    %v48 = vld [vmem:[#allocation2 + $0x28] sm:$0xff]
    %v49 = vld [vmem:[#allocation2 + $0x30] sm:$0xff]
    %v50 = vld [vmem:[#allocation2 + $0x38] sm:$0xff]
    %v51 = vld [vmem:[#allocation2 + $0x40] sm:$0xff]
    %v52 = vld [vmem:[#allocation2 + $0x48] sm:$0xff]
    %v53 = vld [vmem:[#allocation2 + $0x50] sm:$0xff]
    %v54 = vld [vmem:[#allocation2 + $0x58] sm:$0xff]
    %v55 = vld [vmem:[#allocation2 + $0x60] sm:$0xff]
    %v56 = vld [vmem:[#allocation2 + $0x68] sm:$0xff]
    %v57 = vld [vmem:[#allocation2 + $0x70] sm:$0xff]
    %v58 = vld [vmem:[#allocation2 + $0x78] sm:$0xff]
    %v59 = vld [vmem:[#allocation5] sm:$0xff]
    %v60 = vld [vmem:[#allocation5 + $0x8] sm:$0xff]
    %v61 = vld [vmem:[#allocation5 + $0x10] sm:$0xff]
    %v62 = vld [vmem:[#allocation5 + $0x18] sm:$0xff]
    %v63 = vld [vmem:[#allocation5 + $0x20] sm:$0xff]
    %v64 = vld [vmem:[#allocation5 + $0x28] sm:$0xff]
    %v65 = vld [vmem:[#allocation5 + $0x30] sm:$0xff]
    %v66 = vld [vmem:[#allocation5 + $0x38] sm:$0xff]
    %v67 = vld [vmem:[#allocation5 + $0x40] sm:$0xff]
    %v68 = vld [vmem:[#allocation5 + $0x48] sm:$0xff]
    %v69 = vld [vmem:[#allocation5 + $0x50] sm:$0xff]
    %v70 = vld [vmem:[#allocation5 + $0x58] sm:$0xff]
    %v71 = vld [vmem:[#allocation5 + $0x60] sm:$0xff]
    %v72 = vld [vmem:[#allocation5 + $0x68] sm:$0xff]
    %v73 = vld [vmem:[#allocation5 + $0x70] sm:$0xff]
    %v74 = vld [vmem:[#allocation5 + $0x78] sm:$0xff]
    %v75 = vld [vmem:[#allocation5 + $0x80] sm:$0xff]
    %v76 = vld [vmem:[#allocation5 + $0x88] sm:$0xff]
    %v77 = vld [vmem:[#allocation5 + $0x90] sm:$0xff]
    %v78 = vld [vmem:[#allocation5 + $0x98] sm:$0xff]
    %v79 = vld [vmem:[#allocation5 + $0xa0] sm:$0xff]
    %v80 = vld [vmem:[#allocation5 + $0xa8] sm:$0xff]
    %v81 = vld [vmem:[#allocation5 + $0xb0] sm:$0xff]
    %v82 = vld [vmem:[#allocation5 + $0xb8] sm:$0xff]
    %v83 = vld [vmem:[#allocation5 + $0xc0] sm:$0xff]
    %v84 = vld [vmem:[#allocation5 + $0xc8] sm:$0xff]
    %v85 = vld [vmem:[#allocation5 + $0xd0] sm:$0xff]
    %v86 = vld [vmem:[#allocation5 + $0xd8] sm:$0xff]
    %v87 = vld [vmem:[#allocation5 + $0xe0] sm:$0xff]
    %v88 = vld [vmem:[#allocation5 + $0xe8] sm:$0xff]
    %v89 = vld [vmem:[#allocation5 + $0xf0] sm:$0xff]
    %v90 = vld [vmem:[#allocation5 + $0xf8] sm:$0xff]
    %91 = vmatprep.subr.mxu0 %v90
    %92 = vmatpush1.msra.mxu0 %v89
    %93 = vmatprep.subr.mxu0 %v88
    %94 = vmatpush1.msra.mxu0 %v87
    %95 = vmatprep.subr.mxu0 %v86
    %96 = vmatpush1.msra.mxu0 %v85
    %97 = vmatprep.subr.mxu0 %v84
    %98 = vmatpush1.msra.mxu0 %v83
    %99 = vmatprep.subr.mxu0 %v82
    %100 = vmatpush1.msra.mxu0 %v81
    %101 = vmatprep.subr.mxu0 %v80
    %102 = vmatpush1.msra.mxu0 %v79
    %103 = vmatprep.subr.mxu0 %v78
    %104 = vmatpush1.msra.mxu0 %v77
    %105 = vmatprep.subr.mxu0 %v76
    %106 = vmatpush1.msra.mxu0 %v75
    %107 = vmatprep.subr.mxu0 %v74
    %108 = vmatpush1.msra.mxu0 %v73
    %109 = vmatprep.subr.mxu0 %v72
    %110 = vmatpush1.msra.mxu0 %v71
    %111 = vmatprep.subr.mxu0 %v70
    %112 = vmatpush1.msra.mxu0 %v69
    %113 = vmatprep.subr.mxu0 %v68
    %114 = vmatpush1.msra.mxu0 %v67
    %115 = vmatprep.subr.mxu0 %v66
    %116 = vmatpush1.msra.mxu0 %v65
    %117 = vmatprep.subr.mxu0 %v64
    %118 = vmatpush1.msra.mxu0 %v63
    %119 = vmatprep.subr.mxu0 %v62
    %120 = vmatpush1.msra.mxu0 %v61
    %121 = vmatprep.subr.mxu0 %v60
    %122 = vmatpush1.msra.mxu0 %v59
    %123 = vmatprep.subr.mxu0 0.0
    %124 = vmatpush2.msra.mxu0 0.0
    %125 = vmatprep.subr.mxu0 0.0
    %126 = vmatpush2.msra.mxu0 0.0
    %127 = vmatprep.subr.mxu0 0.0
    %128 = vmatpush2.msra.mxu0 0.0
    %129 = vmatprep.subr.mxu0 0.0
    %130 = vmatpush2.msra.mxu0 0.0
    %131 = vmatprep.subr.mxu0 0.0
    %132 = vmatpush2.msra.mxu0 0.0
    %133 = vmatprep.subr.mxu0 0.0
    %134 = vmatpush2.msra.mxu0 0.0
    %135 = vmatprep.subr.mxu0 0.0
    %136 = vmatpush2.msra.mxu0 0.0
    %137 = vmatprep.subr.mxu0 0.0
    %138 = vmatpush2.msra.mxu0 0.0
    %139 = vmatprep.subr.mxu0 0.0
    %140 = vmatpush2.msra.mxu0 0.0
    %141 = vmatprep.subr.mxu0 0.0
    %142 = vmatpush2.msra.mxu0 0.0
    %143 = vmatprep.subr.mxu0 0.0
    %144 = vmatpush2.msra.mxu0 0.0
    %145 = vmatprep.subr.mxu0 0.0
    %146 = vmatpush2.msra.mxu0 0.0
    %147 = vmatprep.subr.mxu0 0.0
    %148 = vmatpush2.msra.mxu0 0.0
    %149 = vmatprep.subr.mxu0 0.0
    %150 = vmatpush2.msra.mxu0 0.0
    %151 = vmatprep.subr.mxu0 0.0
    %152 = vmatpush2.msra.mxu0 0.0
    %153 = vmatprep.subr.mxu0 0.0
    %154 = vmatpush2.msra.mxu0 0.0
    %155 = vmatprep.mubr.f32.mxu0 0.0
    %156 = vmatmul.mubr.f32.gmra.mxu0 %v43
    %v157 = vpop.f32.mrf.mxu0
    %v158 = vadd.f32 0.0, %v157
    %v159 = vpop.f32.mrf.mxu0
    %v160 = vadd.f32 0.0, %v159
    %161 = vmatprep.mubr.f32.mxu0 0.0
    %162 = vmatmul.mubr.f32.gmra.mxu0 %v44
    %v163 = vpop.f32.mrf.mxu0
    %v164 = vadd.f32 0.0, %v163
    %v165 = vpop.f32.mrf.mxu0
    %v166 = vadd.f32 0.0, %v165
    %167 = vmatprep.mubr.f32.mxu0 0.0
    %168 = vmatmul.mubr.f32.gmra.mxu0 %v45
    %v169 = vpop.f32.mrf.mxu0
    %v170 = vadd.f32 0.0, %v169
    %v171 = vpop.f32.mrf.mxu0
    %v172 = vadd.f32 0.0, %v171
    %173 = vmatprep.mubr.f32.mxu0 0.0
    %174 = vmatmul.mubr.f32.gmra.mxu0 %v46
    %v175 = vpop.f32.mrf.mxu0
    %v176 = vadd.f32 0.0, %v175
    %v177 = vpop.f32.mrf.mxu0
    %v178 = vadd.f32 0.0, %v177
    %179 = vmatprep.mubr.f32.mxu0 0.0
    %180 = vmatmul.mubr.f32.gmra.mxu0 %v47
    %v181 = vpop.f32.mrf.mxu0
    %v182 = vadd.f32 0.0, %v181
    %v183 = vpop.f32.mrf.mxu0
    %v184 = vadd.f32 0.0, %v183
    %185 = vmatprep.mubr.f32.mxu0 0.0
    %186 = vmatmul.mubr.f32.gmra.mxu0 %v48
    %v187 = vpop.f32.mrf.mxu0
    %v188 = vadd.f32 0.0, %v187
    %v189 = vpop.f32.mrf.mxu0
    %v190 = vadd.f32 0.0, %v189
    %191 = vmatprep.mubr.f32.mxu0 0.0
    %192 = vmatmul.mubr.f32.gmra.mxu0 %v49
    %v193 = vpop.f32.mrf.mxu0
    %v194 = vadd.f32 0.0, %v193
    %v195 = vpop.f32.mrf.mxu0
    %v196 = vadd.f32 0.0, %v195
    %197 = vmatprep.mubr.f32.mxu0 0.0
    %198 = vmatmul.mubr.f32.gmra.mxu0 %v50
    %v199 = vpop.f32.mrf.mxu0
    %v200 = vadd.f32 0.0, %v199
    %v201 = vpop.f32.mrf.mxu0
    %v202 = vadd.f32 0.0, %v201
    %203 = vmatprep.mubr.f32.mxu0 0.0
    %204 = vmatmul.mubr.f32.gmra.mxu0 %v51
    %v205 = vpop.f32.mrf.mxu0
    %v206 = vadd.f32 0.0, %v205
    %v207 = vpop.f32.mrf.mxu0
    %v208 = vadd.f32 0.0, %v207
    %209 = vmatprep.mubr.f32.mxu0 0.0
    %210 = vmatmul.mubr.f32.gmra.mxu0 %v52
    %v211 = vpop.f32.mrf.mxu0
    %v212 = vadd.f32 0.0, %v211
    %v213 = vpop.f32.mrf.mxu0
    %v214 = vadd.f32 0.0, %v213
    %215 = vmatprep.mubr.f32.mxu0 0.0
    %216 = vmatmul.mubr.f32.gmra.mxu0 %v53
    %v217 = vpop.f32.mrf.mxu0
    %v218 = vadd.f32 0.0, %v217
    %v219 = vpop.f32.mrf.mxu0
    %v220 = vadd.f32 0.0, %v219
    %221 = vmatprep.mubr.f32.mxu0 0.0
    %222 = vmatmul.mubr.f32.gmra.mxu0 %v54
    %v223 = vpop.f32.mrf.mxu0
    %v224 = vadd.f32 0.0, %v223
    %v225 = vpop.f32.mrf.mxu0
    %v226 = vadd.f32 0.0, %v225
    %227 = vmatprep.mubr.f32.mxu0 0.0
    %228 = vmatmul.mubr.f32.gmra.mxu0 %v55
    %v229 = vpop.f32.mrf.mxu0
    %v230 = vadd.f32 0.0, %v229
    %v231 = vpop.f32.mrf.mxu0
    %v232 = vadd.f32 0.0, %v231
    %233 = vmatprep.mubr.f32.mxu0 0.0
    %234 = vmatmul.mubr.f32.gmra.mxu0 %v56
    %v235 = vpop.f32.mrf.mxu0
    %v236 = vadd.f32 0.0, %v235
    %v237 = vpop.f32.mrf.mxu0
    %v238 = vadd.f32 0.0, %v237
    %239 = vmatprep.mubr.f32.mxu0 0.0
    %240 = vmatmul.mubr.f32.gmra.mxu0 %v57
    %v241 = vpop.f32.mrf.mxu0
    %v242 = vadd.f32 0.0, %v241
    %v243 = vpop.f32.mrf.mxu0
    %v244 = vadd.f32 0.0, %v243
    %245 = vmatprep.mubr.f32.mxu0 0.0
    %246 = vmatmul.mubr.f32.gmra.mxu0 %v58
    %v247 = vpop.f32.mrf.mxu0
    %v248 = vadd.f32 0.0, %v247
    %v249 = vpop.f32.mrf.mxu0
    %v250 = vadd.f32 0.0, %v249
    %251 = vdwg.mxu0
    %252 = vst [vmem:[#allocation7] sm:$0xff] %v158
    %253 = vst [vmem:[#allocation7 + $0x8] sm:$0xff] %v164
    %254 = vst [vmem:[#allocation7 + $0x10] sm:$0xff] %v170
    %255 = vst [vmem:[#allocation7 + $0x18] sm:$0xff] %v176
    %256 = vst [vmem:[#allocation7 + $0x20] sm:$0xff] %v182
    %257 = vst [vmem:[#allocation7 + $0x28] sm:$0xff] %v188
    %258 = vst [vmem:[#allocation7 + $0x30] sm:$0xff] %v194
    %259 = vst [vmem:[#allocation7 + $0x38] sm:$0xff] %v200
    %260 = vst [vmem:[#allocation7 + $0x40] sm:$0xff] %v206
    %261 = vst [vmem:[#allocation7 + $0x48] sm:$0xff] %v212
    %262 = vst [vmem:[#allocation7 + $0x50] sm:$0xff] %v218
    %263 = vst [vmem:[#allocation7 + $0x58] sm:$0xff] %v224
    %264 = vst [vmem:[#allocation7 + $0x60] sm:$0xff] %v230
    %265 = vst [vmem:[#allocation7 + $0x68] sm:$0xff] %v236
    %266 = vst [vmem:[#allocation7 + $0x70] sm:$0xff] %v242
    %267 = vst [vmem:[#allocation7 + $0x78] sm:$0xff] %v248
    %268 = vst [vmem:[#allocation8] sm:$0xff] %v160
    %269 = vst [vmem:[#allocation8 + $0x8] sm:$0xff] %v166
    %270 = vst [vmem:[#allocation8 + $0x10] sm:$0xff] %v172
    %271 = vst [vmem:[#allocation8 + $0x18] sm:$0xff] %v178
    %272 = vst [vmem:[#allocation8 + $0x20] sm:$0xff] %v184
    %273 = vst [vmem:[#allocation8 + $0x28] sm:$0xff] %v190
    %274 = vst [vmem:[#allocation8 + $0x30] sm:$0xff] %v196
    %275 = vst [vmem:[#allocation8 + $0x38] sm:$0xff] %v202
    %276 = vst [vmem:[#allocation8 + $0x40] sm:$0xff] %v208
    %277 = vst [vmem:[#allocation8 + $0x48] sm:$0xff] %v214
    %278 = vst [vmem:[#allocation8 + $0x50] sm:$0xff] %v220
    %279 = vst [vmem:[#allocation8 + $0x58] sm:$0xff] %v226
    %280 = vst [vmem:[#allocation8 + $0x60] sm:$0xff] %v232
    %281 = vst [vmem:[#allocation8 + $0x68] sm:$0xff] %v238
    %282 = vst [vmem:[#allocation8 + $0x70] sm:$0xff] %v244
    %283 = vst [vmem:[#allocation8 + $0x78] sm:$0xff] %v250
    // Predicated region
    $region18: #{tpu_custom_call.1} parent=1 // pred_check
      _
    $region19: #{tpu_custom_call.1} parent=1 // pred_check_branch
      %285 = sbr.rel (0) target = $region21
    $region20: #{tpu_custom_call.1} parent=1 // pred_region
      %s287 = ssub.s32 2048, 2048
      %288 = vsyncadd [#allocation4], %s287
      %s289 = sshll.u32 [#allocation7], 4
      %s290 = int_to_ptr.vmem [resolvable:$true] %s289
      %295 = dma.vmem_to_hbm [thread:$0]  %s290, 2048, %s2, [#allocation4], 128, 128, 8
    $region21: #{tpu_custom_call.1} parent=1 // pred_fallthru
      _
    // Predicated region
    $region22: #{tpu_custom_call.1} parent=1 // pred_check
      _
    $region23: #{tpu_custom_call.1} parent=1 // pred_check_branch
      %297 = sbr.rel (0) target = $region25
    $region24: #{tpu_custom_call.1} parent=1 // pred_region
      %s299 = ssub.s32 2048, 2048
      %300 = vsyncadd [#allocation9], %s299
      %s301 = sshll.u32 [#allocation8], 4
      %s302 = int_to_ptr.vmem [resolvable:$true] %s301
      %307 = dma.vmem_to_hbm [thread:$0]  %s302, 2048, %s3, [#allocation9], 128, 128, 8
    $region25: #{tpu_custom_call.1} parent=1 // pred_fallthru
      _
    // Predicated region
    $region26: #{tpu_custom_call.1} parent=1 // pred_check
      _
    $region27: #{tpu_custom_call.1} parent=1 // pred_check_branch
      %309 = sbr.rel (0) target = $region29
    $region28: #{tpu_custom_call.1} parent=1 // pred_region
      %310 = dma.done [#allocation4], 2048
    $region29: #{tpu_custom_call.1} parent=1 // pred_fallthru
      _
    // Predicated region
    $region30: #{tpu_custom_call.1} parent=1 // pred_check
      _
    $region31: #{tpu_custom_call.1} parent=1 // pred_check_branch
      %312 = sbr.rel (0) target = $region33
    $region32: #{tpu_custom_call.1} parent=1 // pred_region
      %313 = dma.done [#allocation9], 2048
    $region33: #{tpu_custom_call.1} parent=1 // pred_fallthru
      _
    %314 = vsyncpa [#allocation3], 1
    %315 = vsyncpa [#allocation6], 1
    %316 = vsyncpa [#allocation4], 1
    %317 = vsyncpa [#allocation9], 1

</llo_original>
